<compile_context>
chip_gen: v7x
topology: tpu7x:2x2x1
jax: 0.10.0
libtpu: 0.0.40
codegen_flags: <defaults>
</compile_context>

<pallas_src>
import math
from functools import partial

import jax
import jax.numpy as jnp
from jax.experimental import pallas as pl
from jax.experimental.pallas import tpu as pltpu

# ---------------- scaled-down RoBERTa config ----------------
VOCAB = 512
MAX_POS = 64
HIDDEN = 128          # roberta-base uses 768; scaled down per instructions
N_LAYERS = 2          # roberta-base uses 12
N_HEADS = 4
HEAD_DIM = HIDDEN // N_HEADS
INTERMEDIATE = 256
NUM_LABELS = 4
LOGIT_PAD = 128       # lane-dense logits store; sliced to NUM_LABELS outside
LN_EPS = 1e-5
PAD_TOKEN_ID = 1      # RoBERTa padding idx


# ---------------- in-kernel helpers (f32 math) ----------------
def _layernorm(x, g, b):
    mu = jnp.mean(x, axis=-1, keepdims=True)
    xc = x - mu
    var = jnp.mean(xc * xc, axis=-1, keepdims=True)
    return xc * jax.lax.rsqrt(var + LN_EPS) * g + b


def _gelu_tanh(y):
    # TODO(synk): HF RoBERTa uses erf-GELU; tanh approximation differs by <1e-3
    # (erf lowering inside Mosaic is avoided for portability).
    c = math.sqrt(2.0 / math.pi)
    return 0.5 * y * (1.0 + jnp.tanh(c * (y + 0.044715 * y * y * y)))


# ---------------- fused encoder + classifier kernel ----------------
def _encoder_kernel(emb_ref, emb_g_ref, emb_b_ref, smask_ref, hmask_ref,
                    wqkv_ref, bqkv_ref, wo_ref, bo_ref, ln1_g_ref, ln1_b_ref,
                    w1_ref, b1_ref, w2_ref, b2_ref, ln2_g_ref, ln2_b_ref,
                    clsw_ref, clsb_ref,
                    logits_ref, cls_ref,
                    h_ref, *, batch, seq):
    layer = pl.program_id(0)

    # First grid step: embedding LayerNorm into the resident activation scratch.
    @pl.when(layer == 0)
    def _():
        h_ref[...] = _layernorm(emb_ref[...], emb_g_ref[...], emb_b_ref[...])

    h = h_ref[...]                                          # (B*S, H) f32

    # ---- fused QKV projection: one bf16 MXU matmul, f32 accumulation ----
    qkv = (jnp.dot(h.astype(jnp.bfloat16), wqkv_ref[...],
                   preferred_element_type=jnp.float32)
           + bqkv_ref[...])                                 # (B*S, 3H) f32

    # ---- block-diagonal multi-head attention (all (batch, head) at once) ----
    # q: 128-aligned lane slice; K/V: per-batch slabs replicated N_HEADS times
    # along sublanes (aligned 8x128 tile copies) then masked to each head's
    # 32 lanes -> block-diagonal K_rep / V_rep of shape (B*NH*S, H).
    q_bf = qkv[:, :HIDDEN].astype(jnp.bfloat16)             # (B*S, H) bf16
    hmask = hmask_ref[...]                                  # (B*NH*S, H) bf16
    k_slabs, v_slabs = [], []
    for b in range(batch):
        r0 = b * seq
        kb = qkv[r0:r0 + seq, HIDDEN:2 * HIDDEN].astype(jnp.bfloat16)
        vb = qkv[r0:r0 + seq, 2 * HIDDEN:3 * HIDDEN].astype(jnp.bfloat16)
        k_slabs += [kb] * N_HEADS
        v_slabs += [vb] * N_HEADS
    k_rep = jnp.concatenate(k_slabs, axis=0) * hmask        # (B*NH*S, H) bf16
    v_rep = jnp.concatenate(v_slabs, axis=0) * hmask        # (B*NH*S, H) bf16
    # Augment V with the head-indicator mask so one matmul yields both the
    # unnormalized context and the per-head softmax denominators.
    v_aug = jnp.concatenate([v_rep, hmask], axis=1)         # (B*NH*S, 2H) bf16

    scale = 1.0 / math.sqrt(HEAD_DIM)
    # single score matmul covering every (batch, head) pair: (B*S, B*NH*S)
    s = jax.lax.dot_general(q_bf, k_rep, (((1,), (1,)), ((), ())),
                            preferred_element_type=jnp.float32)
    s = s * scale + smask_ref[...]      # cross-batch + key-padding additive mask
    m = jnp.max(s, axis=-1, keepdims=True)   # per-row max (cancels per block)
    p = jnp.exp(s - m)                       # masked columns -> exactly 0
    ctx_den = jnp.dot(p.astype(jnp.bfloat16), v_aug,
                      preferred_element_type=jnp.float32)   # (B*S, 2H) f32
    denom = jnp.maximum(ctx_den[:, HIDDEN:2 * HIDDEN], 1e-30)
    ctx = ctx_den[:, :HIDDEN] * pl.reciprocal(denom, approx=True)  # (B*S, H)

    # ---- output projection + residual + LN (fused epilogue) ----
    attn_out = (jnp.dot(ctx.astype(jnp.bfloat16), wo_ref[...],
                        preferred_element_type=jnp.float32) + bo_ref[...])
    h1 = _layernorm(attn_out + h, ln1_g_ref[...], ln1_b_ref[...])

    # ---- FFN: w1 + GELU + w2 + residual + LN, all in one pass ----
    ff = (jnp.dot(h1.astype(jnp.bfloat16), w1_ref[...],
                  preferred_element_type=jnp.float32) + b1_ref[...])
    ff = _gelu_tanh(ff)
    ff = (jnp.dot(ff.astype(jnp.bfloat16), w2_ref[...],
                  preferred_element_type=jnp.float32) + b2_ref[...])
    h2 = _layernorm(ff + h1, ln2_g_ref[...], ln2_b_ref[...])
    h_ref[...] = h2

    # Last grid step: strided CLS gather + classifier head (f32 logits,
    # lane-padded to 128 for an unmasked store).
    @pl.when(layer == pl.num_programs(0) - 1)
    def _():
        cls = h_ref[pl.ds(0, batch, stride=seq), :]          # rows 0, S, 2S, ...
        cls_ref[...] = cls
        logits_ref[...] = (jnp.dot(cls, clsw_ref[...],
                                   preferred_element_type=jnp.float32)
                           + clsb_ref[...])


def encoder_forward(emb, score_mask, head_mask, p, batch, seq):
    bs = batch * seq
    bns = batch * N_HEADS * seq
    lmap = lambda l: (l, 0, 0)    # per-layer stacked weights
    cmap = lambda l: (0, 0)       # resident across all layers

    return pl.pallas_call(
        partial(_encoder_kernel, batch=batch, seq=seq),
        grid=(N_LAYERS,),
        out_shape=(jax.ShapeDtypeStruct((batch, LOGIT_PAD), jnp.float32),
                   jax.ShapeDtypeStruct((batch, HIDDEN), jnp.float32)),
        in_specs=[
            pl.BlockSpec((bs, HIDDEN), cmap),                      # emb
            pl.BlockSpec((1, HIDDEN), cmap),                       # emb_ln_g
            pl.BlockSpec((1, HIDDEN), cmap),                       # emb_ln_b
            pl.BlockSpec((bs, bns), cmap),                         # score mask
            pl.BlockSpec((bns, HIDDEN), cmap),                     # head mask
            pl.BlockSpec((None, HIDDEN, 3 * HIDDEN), lmap),        # wqkv (bf16)
            pl.BlockSpec((None, 1, 3 * HIDDEN), lmap),             # bqkv
            pl.BlockSpec((None, HIDDEN, HIDDEN), lmap),            # wo (bf16)
            pl.BlockSpec((None, 1, HIDDEN), lmap),                 # bo
            pl.BlockSpec((None, 1, HIDDEN), lmap),                 # ln1_g
            pl.BlockSpec((None, 1, HIDDEN), lmap),                 # ln1_b
            pl.BlockSpec((None, HIDDEN, INTERMEDIATE), lmap),      # w1 (bf16)
            pl.BlockSpec((None, 1, INTERMEDIATE), lmap),           # b1
            pl.BlockSpec((None, INTERMEDIATE, HIDDEN), lmap),      # w2 (bf16)
            pl.BlockSpec((None, 1, HIDDEN), lmap),                 # b2
            pl.BlockSpec((None, 1, HIDDEN), lmap),                 # ln2_g
            pl.BlockSpec((None, 1, HIDDEN), lmap),                 # ln2_b
            pl.BlockSpec((HIDDEN, LOGIT_PAD), cmap),               # cls_w (pre-T, padded)
            pl.BlockSpec((1, LOGIT_PAD), cmap),                    # cls_b (padded)
        ],
        out_specs=(pl.BlockSpec((batch, LOGIT_PAD), cmap),
                   pl.BlockSpec((batch, HIDDEN), cmap)),
        scratch_shapes=[pltpu.VMEM((bs, HIDDEN), jnp.float32)],    # resident h
        compiler_params=pltpu.CompilerParams(
            dimension_semantics=("arbitrary",)),
    )(emb, p["emb_ln_g"], p["emb_ln_b"], score_mask, head_mask,
      p["wqkv"], p["bqkv"], p["wo"], p["bo"], p["ln1_g"], p["ln1_b"],
      p["w1"], p["b1"], p["w2"], p["b2"], p["ln2_g"], p["ln2_b"],
      p["cls_w"], p["cls_b"])


# ---------------- parameter init (deterministic, synthetic) ----------------
def _dense(key, fan_in, fan_out):
    kw, kb = jax.random.split(key)
    w = jax.random.normal(kw, (fan_in, fan_out), jnp.float32) * 0.02
    b = jax.random.normal(kb, (fan_out,), jnp.float32) * 0.02
    return w, b


def init_params(key):
    keys = jax.random.split(key, 8 + N_LAYERS)
    params = {}
    params["word_emb"] = jax.random.normal(keys[0], (VOCAB, HIDDEN), jnp.float32) * 0.02
    params["pos_emb"] = jax.random.normal(keys[1], (MAX_POS, HIDDEN), jnp.float32) * 0.02
    params["tok_type_emb"] = jax.random.normal(keys[2], (1, HIDDEN), jnp.float32) * 0.02
    params["emb_ln_g"] = jnp.ones((1, HIDDEN), jnp.float32)
    params["emb_ln_b"] = jnp.zeros((1, HIDDEN), jnp.float32)

    wqkv, bqkv, wo, bo, w1, b1, w2, b2 = [], [], [], [], [], [], [], []
    for li in range(N_LAYERS):
        lk = jax.random.split(keys[3 + li], 6)
        wq, bq = _dense(lk[0], HIDDEN, HIDDEN)
        wk, bk = _dense(lk[1], HIDDEN, HIDDEN)
        wv, bv = _dense(lk[2], HIDDEN, HIDDEN)
        woi, boi = _dense(lk[3], HIDDEN, HIDDEN)
        w1i, b1i = _dense(lk[4], HIDDEN, INTERMEDIATE)
        w2i, b2i = _dense(lk[5], INTERMEDIATE, HIDDEN)
        wqkv.append(jnp.concatenate([wq, wk, wv], axis=1))        # (H, 3H)
        bqkv.append(jnp.concatenate([bq, bk, bv], axis=0)[None, :])
        wo.append(woi); bo.append(boi[None, :])
        w1.append(w1i); b1.append(b1i[None, :])
        w2.append(w2i); b2.append(b2i[None, :])

    # Matmul weights stored bf16 (native MXU operand dtype, half DMA bytes);
    # biases / LN params stay f32, element-wise math stays f32 in-kernel.
    # TODO(synk): int8 (v5e/v6e) / fp8 (v7x) weight quantization would halve
    # weight DMA again; omitted to keep one portable code path.
    params["wqkv"] = jnp.stack(wqkv).astype(jnp.bfloat16)
    params["bqkv"] = jnp.stack(bqkv)
    params["wo"] = jnp.stack(wo).astype(jnp.bfloat16)
    params["bo"] = jnp.stack(bo)
    params["w1"] = jnp.stack(w1).astype(jnp.bfloat16)
    params["b1"] = jnp.stack(b1)
    params["w2"] = jnp.stack(w2).astype(jnp.bfloat16)
    params["b2"] = jnp.stack(b2)
    params["ln1_g"] = jnp.ones((N_LAYERS, 1, HIDDEN), jnp.float32)
    params["ln1_b"] = jnp.zeros((N_LAYERS, 1, HIDDEN), jnp.float32)
    params["ln2_g"] = jnp.ones((N_LAYERS, 1, HIDDEN), jnp.float32)
    params["ln2_b"] = jnp.zeros((N_LAYERS, 1, HIDDEN), jnp.float32)

    # classifier: PyTorch nn.Linear weight is (num_labels, hidden); we store
    # its transpose lane-padded to 128 so the logits store is lane-dense.
    cw, cb = _dense(keys[3 + N_LAYERS], HIDDEN, NUM_LABELS)
    cls_w = jnp.zeros((HIDDEN, LOGIT_PAD), jnp.float32).at[:, :NUM_LABELS].set(cw)
    cls_b = jnp.zeros((1, LOGIT_PAD), jnp.float32).at[0, :NUM_LABELS].set(cb)
    params["cls_w"] = cls_w                # (HIDDEN, 128) == [W.T | 0]
    params["cls_b"] = cls_b                # (1, 128)
    return params


# ---------------- forward (embedding gathers + masks in JAX, rest fused) ----
def roberta_linear_classifier(params, input_ids, attention_mask, return_features=False):
    B, S = input_ids.shape

    # RoBERTa position ids: derived from non-pad tokens (HF
    # create_position_ids_from_input_ids), padding positions -> padding_idx.
    pos_mask = (input_ids != PAD_TOKEN_ID).astype(jnp.int32)
    position_ids = jnp.cumsum(pos_mask, axis=1) * pos_mask + PAD_TOKEN_ID

    # Embedding gathers are glue (plain JAX); sum is LayerNorm'd in-kernel.
    emb = (jnp.take(params["word_emb"], input_ids, axis=0)
           + jnp.take(params["pos_emb"], position_ids, axis=0)
           + params["tok_type_emb"][0]).reshape(B * S, HIDDEN)
    # TODO(synk): dropout omitted (inference / eval mode -> identity).

    # Additive score mask (B*S, B*NH*S): 0 where (same batch AND key attended),
    # -1e9 for cross-batch blocks and padded keys.  Layer-invariant.
    rows_b = jnp.arange(B * S) // S
    cols = jnp.arange(B * N_HEADS * S)
    cols_b = cols // (N_HEADS * S)
    cols_h = (cols // S) % N_HEADS
    cols_s = cols % S
    key_ok = attention_mask.astype(jnp.int32)[cols_b, cols_s] == 1
    valid = (rows_b[:, None] == cols_b[None, :]) & key_ok[None, :]
    score_mask = jnp.where(valid, 0.0, -1e9).astype(jnp.float32)

    # Head lane mask (B*NH*S, H): 1 where lane d belongs to that row's head.
    head_of_lane = jnp.arange(HIDDEN) // HEAD_DIM
    head_mask = (cols_h[:, None] == head_of_lane[None, :]).astype(jnp.bfloat16)

    logits_pad, cls = encoder_forward(emb, score_mask, head_mask, params, B, S)
    logits = logits_pad[:, :NUM_LABELS]
    if return_features:
        return logits, cls
    return logits


if __name__ == "__main__":
    B, S = 2, 8
    key = jax.random.PRNGKey(0)
    k_params, k_ids = jax.random.split(key)

    params = init_params(k_params)

    input_ids = jax.random.randint(k_ids, (B, S), 2, VOCAB, dtype=jnp.int32)
    # second example has 2 padding positions at the end
    attention_mask = jnp.array(
        [[1, 1, 1, 1, 1, 1, 1, 1],
         [1, 1, 1, 1, 1, 1, 0, 0]], dtype=jnp.int32)
    input_ids = jnp.where(attention_mask == 0, PAD_TOKEN_ID, input_ids)

    fwd = jax.jit(partial(roberta_linear_classifier, return_features=False))
    logits = fwd(params, input_ids, attention_mask)
    jax.block_until_ready(logits)
    assert logits.shape == (B, NUM_LABELS)
    assert bool(jnp.all(jnp.isfinite(logits)))
    print("KERNEL_OK")
</pallas_src>

<mosaic_0001>
module attributes {stable_mosaic.version = 11 : i64} {
  func.func @_encoder_kernel(%arg0: i32, %arg1: memref<16x128xf32, #tpu.memory_space<vmem>>, %arg2: memref<1x128xf32, #tpu.memory_space<vmem>>, %arg3: memref<1x128xf32, #tpu.memory_space<vmem>>, %arg4: memref<16x64xf32, #tpu.memory_space<vmem>>, %arg5: memref<64x128xbf16, #tpu.memory_space<vmem>>, %arg6: memref<1x128x384xbf16, #tpu.memory_space<vmem>>, %arg7: memref<1x1x384xf32, #tpu.memory_space<vmem>>, %arg8: memref<1x128x128xbf16, #tpu.memory_space<vmem>>, %arg9: memref<1x1x128xf32, #tpu.memory_space<vmem>>, %arg10: memref<1x1x128xf32, #tpu.memory_space<vmem>>, %arg11: memref<1x1x128xf32, #tpu.memory_space<vmem>>, %arg12: memref<1x128x256xbf16, #tpu.memory_space<vmem>>, %arg13: memref<1x1x256xf32, #tpu.memory_space<vmem>>, %arg14: memref<1x256x128xbf16, #tpu.memory_space<vmem>>, %arg15: memref<1x1x128xf32, #tpu.memory_space<vmem>>, %arg16: memref<1x1x128xf32, #tpu.memory_space<vmem>>, %arg17: memref<1x1x128xf32, #tpu.memory_space<vmem>>, %arg18: memref<128x128xf32, #tpu.memory_space<vmem>>, %arg19: memref<1x128xf32, #tpu.memory_space<vmem>>, %arg20: memref<2x128xf32, #tpu.memory_space<vmem>>, %arg21: memref<2x128xf32, #tpu.memory_space<vmem>>, %arg22: memref<16x128xf32, #tpu.memory_space<vmem>>) attributes {dimension_semantics = [#tpu.dimension_semantics<arbitrary>], iteration_bounds = array<i64: 2>, scalar_prefetch = 0 : i64, scratch_operands = 1 : i64, tpu.core_type = #tpu.core_type<tc>, window_params = [{pipeline_mode = #tpu.pipeline_mode<synchronous>, transform_indices = @transform_0, window_bounds = array<i64: 16, 128>}, {pipeline_mode = #tpu.pipeline_mode<synchronous>, transform_indices = @transform_1, window_bounds = array<i64: 1, 128>}, {pipeline_mode = #tpu.pipeline_mode<synchronous>, transform_indices = @transform_2, window_bounds = array<i64: 1, 128>}, {pipeline_mode = #tpu.pipeline_mode<synchronous>, transform_indices = @transform_3, window_bounds = array<i64: 16, 64>}, {pipeline_mode = #tpu.pipeline_mode<synchronous>, transform_indices = @transform_4, window_bounds = array<i64: 64, 128>}, {transform_indices = @transform_5, window_bounds = array<i64: 1, 128, 384>}, {transform_indices = @transform_6, window_bounds = array<i64: 1, 1, 384>}, {transform_indices = @transform_7, window_bounds = array<i64: 1, 128, 128>}, {transform_indices = @transform_8, window_bounds = array<i64: 1, 1, 128>}, {transform_indices = @transform_9, window_bounds = array<i64: 1, 1, 128>}, {transform_indices = @transform_10, window_bounds = array<i64: 1, 1, 128>}, {transform_indices = @transform_11, window_bounds = array<i64: 1, 128, 256>}, {transform_indices = @transform_12, window_bounds = array<i64: 1, 1, 256>}, {transform_indices = @transform_13, window_bounds = array<i64: 1, 256, 128>}, {transform_indices = @transform_14, window_bounds = array<i64: 1, 1, 128>}, {transform_indices = @transform_15, window_bounds = array<i64: 1, 1, 128>}, {transform_indices = @transform_16, window_bounds = array<i64: 1, 1, 128>}, {pipeline_mode = #tpu.pipeline_mode<synchronous>, transform_indices = @transform_17, window_bounds = array<i64: 128, 128>}, {pipeline_mode = #tpu.pipeline_mode<synchronous>, transform_indices = @transform_18, window_bounds = array<i64: 1, 128>}, {pipeline_mode = #tpu.pipeline_mode<synchronous>, transform_indices = @transform_19, window_bounds = array<i64: 2, 128>}, {pipeline_mode = #tpu.pipeline_mode<synchronous>, transform_indices = @transform_20, window_bounds = array<i64: 2, 128>}]} {
    %c0_i32 = arith.constant 0 : i32
    %0 = arith.cmpi eq, %arg0, %c0_i32 : i32
    %1 = arith.extui %0 : i1 to i32
    %c0_i32_0 = arith.constant 0 : i32
    %2 = arith.cmpi ne, %1, %c0_i32_0 : i32
    scf.if %2 {
      %c0_67 = arith.constant 0 : index
      %c0_68 = arith.constant 0 : index
      %137 = vector.load %arg1[%c0_67, %c0_68] : memref<16x128xf32, #tpu.memory_space<vmem>>, vector<16x128xf32>
      %c0_69 = arith.constant 0 : index
      %c0_70 = arith.constant 0 : index
      %138 = vector.load %arg2[%c0_69, %c0_70] : memref<1x128xf32, #tpu.memory_space<vmem>>, vector<1x128xf32>
      %c0_71 = arith.constant 0 : index
      %c0_72 = arith.constant 0 : index
      %139 = vector.load %arg3[%c0_71, %c0_72] : memref<1x128xf32, #tpu.memory_space<vmem>>, vector<1x128xf32>
      %cst_73 = arith.constant dense<0.000000e+00> : vector<16xf32>
      %140 = vector.multi_reduction <add>, %137, %cst_73 [1] : vector<16x128xf32> to vector<16xf32>
      %141 = vector.shape_cast %140 : vector<16xf32> to vector<16x1xf32>
      %cst_74 = arith.constant 1.280000e+02 : f32
      %142 = vector.broadcast %cst_74 : f32 to vector<16x1xf32>
      %143 = arith.divf %141, %142 : vector<16x1xf32>
      %144 = vector.broadcast %143 : vector<16x1xf32> to vector<16x128xf32>
      %145 = arith.subf %137, %144 : vector<16x128xf32>
      %146 = arith.mulf %145, %145 : vector<16x128xf32>
      %cst_75 = arith.constant dense<0.000000e+00> : vector<16xf32>
      %147 = vector.multi_reduction <add>, %146, %cst_75 [1] : vector<16x128xf32> to vector<16xf32>
      %148 = vector.shape_cast %147 : vector<16xf32> to vector<16x1xf32>
      %cst_76 = arith.constant 1.280000e+02 : f32
      %149 = vector.broadcast %cst_76 : f32 to vector<16x1xf32>
      %150 = arith.divf %148, %149 : vector<16x1xf32>
      %cst_77 = arith.constant 9.99999974E-6 : f32
      %151 = vector.broadcast %cst_77 : f32 to vector<16x1xf32>
      %152 = arith.addf %150, %151 : vector<16x1xf32>
      %153 = math.rsqrt %152 : vector<16x1xf32>
      %154 = vector.broadcast %153 : vector<16x1xf32> to vector<16x128xf32>
      %155 = arith.mulf %145, %154 : vector<16x128xf32>
      %156 = vector.broadcast %138 : vector<1x128xf32> to vector<16x128xf32>
      %157 = arith.mulf %155, %156 : vector<16x128xf32>
      %158 = vector.broadcast %139 : vector<1x128xf32> to vector<16x128xf32>
      %159 = arith.addf %157, %158 : vector<16x128xf32>
      %c0_78 = arith.constant 0 : index
      %c0_79 = arith.constant 0 : index
      %160 = vector.load %arg22[%c0_78, %c0_79] : memref<16x128xf32, #tpu.memory_space<vmem>>, vector<16x128xf32>
      tpu.vector_store %arg22[%c0_78, %c0_79], %159 {strides = array<i32>} : memref<16x128xf32, #tpu.memory_space<vmem>>, vector<16x128xf32>,
    } else {
    }
    %c0 = arith.constant 0 : index
    %c0_1 = arith.constant 0 : index
    %3 = vector.load %arg22[%c0, %c0_1] : memref<16x128xf32, #tpu.memory_space<vmem>>, vector<16x128xf32>
    %4 = arith.truncf %3 : vector<16x128xf32> to vector<16x128xbf16>
    %c0_2 = arith.constant 0 : index
    %c0_3 = arith.constant 0 : index
    %c0_4 = arith.constant 0 : index
    %5 = vector.load %arg6[%c0_2, %c0_3, %c0_4] : memref<1x128x384xbf16, #tpu.memory_space<vmem>>, vector<1x128x384xbf16>
    %6 = vector.shape_cast %5 : vector<1x128x384xbf16> to vector<128x384xbf16>
    %cst = arith.constant dense<0.000000e+00> : vector<16x384xf32>
    %7 = tpu.matmul %4, %6, %cst {dimension_numbers = #tpu.dot_dimension_numbers<[1], [0], [0], [1], [0, 0, 1, 1], [], []>} : vector<16x128xbf16>, vector<128x384xbf16>, vector<16x384xf32> -> vector<16x384xf32>
    %c0_5 = arith.constant 0 : index
    %c0_6 = arith.constant 0 : index
    %c0_7 = arith.constant 0 : index
    %8 = vector.load %arg7[%c0_5, %c0_6, %c0_7] : memref<1x1x384xf32, #tpu.memory_space<vmem>>, vector<1x1x384xf32>
    %9 = vector.shape_cast %8 : vector<1x1x384xf32> to vector<1x384xf32>
    %10 = vector.broadcast %9 : vector<1x384xf32> to vector<16x384xf32>
    %11 = arith.addf %7, %10 : vector<16x384xf32>
    %12 = vector.extract_strided_slice %11 {offsets = [0, 0], sizes = [16, 128], strides = [1, 1]} : vector<16x384xf32> to vector<16x128xf32>
    %13 = arith.truncf %12 : vector<16x128xf32> to vector<16x128xbf16>
    %c0_8 = arith.constant 0 : index
    %c0_9 = arith.constant 0 : index
    %14 = vector.load %arg5[%c0_8, %c0_9] : memref<64x128xbf16, #tpu.memory_space<vmem>>, vector<64x128xbf16>
    %15 = vector.extract_strided_slice %11 {offsets = [0, 128], sizes = [8, 128], strides = [1, 1]} : vector<16x384xf32> to vector<8x128xf32>
    %16 = arith.truncf %15 : vector<8x128xf32> to vector<8x128xbf16>
    %17 = vector.extract_strided_slice %11 {offsets = [0, 256], sizes = [8, 128], strides = [1, 1]} : vector<16x384xf32> to vector<8x128xf32>
    %18 = arith.truncf %17 : vector<8x128xf32> to vector<8x128xbf16>
    %19 = vector.extract_strided_slice %11 {offsets = [8, 128], sizes = [8, 128], strides = [1, 1]} : vector<16x384xf32> to vector<8x128xf32>
    %20 = arith.truncf %19 : vector<8x128xf32> to vector<8x128xbf16>
    %21 = vector.extract_strided_slice %11 {offsets = [8, 256], sizes = [8, 128], strides = [1, 1]} : vector<16x384xf32> to vector<8x128xf32>
    %22 = arith.truncf %21 : vector<8x128xf32> to vector<8x128xbf16>
    %23 = tpu.concatenate %16, %16, %16, %16, %20, %20, %20, %20 in 0 : vector<8x128xbf16>, vector<8x128xbf16>, vector<8x128xbf16>, vector<8x128xbf16>, vector<8x128xbf16>, vector<8x128xbf16>, vector<8x128xbf16>, vector<8x128xbf16> -> vector<64x128xbf16>
    %24 = arith.mulf %23, %14 : vector<64x128xbf16>
    %25 = tpu.concatenate %18, %18, %18, %18, %22, %22, %22, %22 in 0 : vector<8x128xbf16>, vector<8x128xbf16>, vector<8x128xbf16>, vector<8x128xbf16>, vector<8x128xbf16>, vector<8x128xbf16>, vector<8x128xbf16>, vector<8x128xbf16> -> vector<64x128xbf16>
    %26 = arith.mulf %25, %14 : vector<64x128xbf16>
    %27 = tpu.concatenate %26, %14 in 1 : vector<64x128xbf16>, vector<64x128xbf16> -> vector<64x256xbf16>
    %cst_10 = arith.constant dense<0.000000e+00> : vector<16x64xf32>
    %28 = tpu.matmul %13, %24, %cst_10 {dimension_numbers = #tpu.dot_dimension_numbers<[1], [1], [0], [0], [0, 0, 1, 0], [], []>} : vector<16x128xbf16>, vector<64x128xbf16>, vector<16x64xf32> -> vector<16x64xf32>
    %cst_11 = arith.constant 0.176776692 : f32
    %29 = vector.broadcast %cst_11 : f32 to vector<16x64xf32>
    %30 = arith.mulf %28, %29 : vector<16x64xf32>
    %c0_12 = arith.constant 0 : index
    %c0_13 = arith.constant 0 : index
    %31 = vector.load %arg4[%c0_12, %c0_13] : memref<16x64xf32, #tpu.memory_space<vmem>>, vector<16x64xf32>
    %32 = arith.addf %30, %31 : vector<16x64xf32>
    %cst_14 = arith.constant dense<0xFF800000> : vector<16xf32>
    %33 = vector.multi_reduction <maximumf>, %32, %cst_14 [1] : vector<16x64xf32> to vector<16xf32>
    %34 = vector.shape_cast %33 : vector<16xf32> to vector<16x1xf32>
    %35 = vector.broadcast %34 : vector<16x1xf32> to vector<16x64xf32>
    %36 = arith.subf %32, %35 : vector<16x64xf32>
    %37 = math.exp %36 : vector<16x64xf32>
    %38 = arith.truncf %37 : vector<16x64xf32> to vector<16x64xbf16>
    %cst_15 = arith.constant dense<0.000000e+00> : vector<16x256xf32>
    %39 = tpu.matmul %38, %27, %cst_15 {dimension_numbers = #tpu.dot_dimension_numbers<[1], [0], [0], [1], [0, 0, 1, 1], [], []>} : vector<16x64xbf16>, vector<64x256xbf16>, vector<16x256xf32> -> vector<16x256xf32>
    %40 = vector.extract_strided_slice %39 {offsets = [0, 128], sizes = [16, 128], strides = [1, 1]} : vector<16x256xf32> to vector<16x128xf32>
    %cst_16 = arith.constant 1.000000e-30 : f32
    %41 = vector.broadcast %cst_16 : f32 to vector<16x128xf32>
    %42 = arith.maximumf %40, %41 : vector<16x128xf32>
    %43 = vector.extract_strided_slice %39 {offsets = [0, 0], sizes = [16, 128], strides = [1, 1]} : vector<16x256xf32> to vector<16x128xf32>
    %44 = tpu.reciprocal %42 {approx = true} : vector<16x128xf32> -> vector<16x128xf32>
    %45 = arith.mulf %43, %44 : vector<16x128xf32>
    %46 = arith.truncf %45 : vector<16x128xf32> to vector<16x128xbf16>
    %c0_17 = arith.constant 0 : index
    %c0_18 = arith.constant 0 : index
    %c0_19 = arith.constant 0 : index
    %47 = vector.load %arg8[%c0_17, %c0_18, %c0_19] : memref<1x128x128xbf16, #tpu.memory_space<vmem>>, vector<1x128x128xbf16>
    %48 = vector.shape_cast %47 : vector<1x128x128xbf16> to vector<128x128xbf16>
    %cst_20 = arith.constant dense<0.000000e+00> : vector<16x128xf32>
    %49 = tpu.matmul %46, %48, %cst_20 {dimension_numbers = #tpu.dot_dimension_numbers<[1], [0], [0], [1], [0, 0, 1, 1], [], []>} : vector<16x128xbf16>, vector<128x128xbf16>, vector<16x128xf32> -> vector<16x128xf32>
    %c0_21 = arith.constant 0 : index
    %c0_22 = arith.constant 0 : index
    %c0_23 = arith.constant 0 : index
    %50 = vector.load %arg9[%c0_21, %c0_22, %c0_23] : memref<1x1x128xf32, #tpu.memory_space<vmem>>, vector<1x1x128xf32>
    %51 = vector.shape_cast %50 : vector<1x1x128xf32> to vector<1x128xf32>
    %52 = vector.broadcast %51 : vector<1x128xf32> to vector<16x128xf32>
    %53 = arith.addf %49, %52 : vector<16x128xf32>
    %54 = arith.addf %53, %3 : vector<16x128xf32>
    %c0_24 = arith.constant 0 : index
    %c0_25 = arith.constant 0 : index
    %c0_26 = arith.constant 0 : index
    %55 = vector.load %arg10[%c0_24, %c0_25, %c0_26] : memref<1x1x128xf32, #tpu.memory_space<vmem>>, vector<1x1x128xf32>
    %56 = vector.shape_cast %55 : vector<1x1x128xf32> to vector<1x128xf32>
    %c0_27 = arith.constant 0 : index
    %c0_28 = arith.constant 0 : index
    %c0_29 = arith.constant 0 : index
    %57 = vector.load %arg11[%c0_27, %c0_28, %c0_29] : memref<1x1x128xf32, #tpu.memory_space<vmem>>, vector<1x1x128xf32>
    %58 = vector.shape_cast %57 : vector<1x1x128xf32> to vector<1x128xf32>
    %cst_30 = arith.constant dense<0.000000e+00> : vector<16xf32>
    %59 = vector.multi_reduction <add>, %54, %cst_30 [1] : vector<16x128xf32> to vector<16xf32>
    %60 = vector.shape_cast %59 : vector<16xf32> to vector<16x1xf32>
    %cst_31 = arith.constant 1.280000e+02 : f32
    %61 = vector.broadcast %cst_31 : f32 to vector<16x1xf32>
    %62 = arith.divf %60, %61 : vector<16x1xf32>
    %63 = vector.broadcast %62 : vector<16x1xf32> to vector<16x128xf32>
    %64 = arith.subf %54, %63 : vector<16x128xf32>
    %65 = arith.mulf %64, %64 : vector<16x128xf32>
    %cst_32 = arith.constant dense<0.000000e+00> : vector<16xf32>
    %66 = vector.multi_reduction <add>, %65, %cst_32 [1] : vector<16x128xf32> to vector<16xf32>
    %67 = vector.shape_cast %66 : vector<16xf32> to vector<16x1xf32>
    %cst_33 = arith.constant 1.280000e+02 : f32
    %68 = vector.broadcast %cst_33 : f32 to vector<16x1xf32>
    %69 = arith.divf %67, %68 : vector<16x1xf32>
    %cst_34 = arith.constant 9.99999974E-6 : f32
    %70 = vector.broadcast %cst_34 : f32 to vector<16x1xf32>
    %71 = arith.addf %69, %70 : vector<16x1xf32>
    %72 = math.rsqrt %71 : vector<16x1xf32>
    %73 = vector.broadcast %72 : vector<16x1xf32> to vector<16x128xf32>
    %74 = arith.mulf %64, %73 : vector<16x128xf32>
    %75 = vector.broadcast %56 : vector<1x128xf32> to vector<16x128xf32>
    %76 = arith.mulf %74, %75 : vector<16x128xf32>
    %77 = vector.broadcast %58 : vector<1x128xf32> to vector<16x128xf32>
    %78 = arith.addf %76, %77 : vector<16x128xf32>
    %79 = arith.truncf %78 : vector<16x128xf32> to vector<16x128xbf16>
    %c0_35 = arith.constant 0 : index
    %c0_36 = arith.constant 0 : index
    %c0_37 = arith.constant 0 : index
    %80 = vector.load %arg12[%c0_35, %c0_36, %c0_37] : memref<1x128x256xbf16, #tpu.memory_space<vmem>>, vector<1x128x256xbf16>
    %81 = vector.shape_cast %80 : vector<1x128x256xbf16> to vector<128x256xbf16>
    %cst_38 = arith.constant dense<0.000000e+00> : vector<16x256xf32>
    %82 = tpu.matmul %79, %81, %cst_38 {dimension_numbers = #tpu.dot_dimension_numbers<[1], [0], [0], [1], [0, 0, 1, 1], [], []>} : vector<16x128xbf16>, vector<128x256xbf16>, vector<16x256xf32> -> vector<16x256xf32>
    %c0_39 = arith.constant 0 : index
    %c0_40 = arith.constant 0 : index
    %c0_41 = arith.constant 0 : index
    %83 = vector.load %arg13[%c0_39, %c0_40, %c0_41] : memref<1x1x256xf32, #tpu.memory_space<vmem>>, vector<1x1x256xf32>
    %84 = vector.shape_cast %83 : vector<1x1x256xf32> to vector<1x256xf32>
    %85 = vector.broadcast %84 : vector<1x256xf32> to vector<16x256xf32>
    %86 = arith.addf %82, %85 : vector<16x256xf32>
    %cst_42 = arith.constant 5.000000e-01 : f32
    %87 = vector.broadcast %cst_42 : f32 to vector<16x256xf32>
    %88 = arith.mulf %87, %86 : vector<16x256xf32>
    %cst_43 = arith.constant 4.471500e-02 : f32
    %89 = vector.broadcast %cst_43 : f32 to vector<16x256xf32>
    %90 = arith.mulf %89, %86 : vector<16x256xf32>
    %91 = arith.mulf %90, %86 : vector<16x256xf32>
    %92 = arith.mulf %91, %86 : vector<16x256xf32>
    %93 = arith.addf %86, %92 : vector<16x256xf32>
    %cst_44 = arith.constant 0.797884583 : f32
    %94 = vector.broadcast %cst_44 : f32 to vector<16x256xf32>
    %95 = arith.mulf %94, %93 : vector<16x256xf32>
    %96 = math.tanh %95 : vector<16x256xf32>
    %cst_45 = arith.constant 1.000000e+00 : f32
    %97 = vector.broadcast %cst_45 : f32 to vector<16x256xf32>
    %98 = arith.addf %97, %96 : vector<16x256xf32>
    %99 = arith.mulf %88, %98 : vector<16x256xf32>
    %100 = arith.truncf %99 : vector<16x256xf32> to vector<16x256xbf16>
    %c0_46 = arith.constant 0 : index
    %c0_47 = arith.constant 0 : index
    %c0_48 = arith.constant 0 : index
    %101 = vector.load %arg14[%c0_46, %c0_47, %c0_48] : memref<1x256x128xbf16, #tpu.memory_space<vmem>>, vector<1x256x128xbf16>
    %102 = vector.shape_cast %101 : vector<1x256x128xbf16> to vector<256x128xbf16>
    %cst_49 = arith.constant dense<0.000000e+00> : vector<16x128xf32>
    %103 = tpu.matmul %100, %102, %cst_49 {dimension_numbers = #tpu.dot_dimension_numbers<[1], [0], [0], [1], [0, 0, 1, 1], [], []>} : vector<16x256xbf16>, vector<256x128xbf16>, vector<16x128xf32> -> vector<16x128xf32>
    %c0_50 = arith.constant 0 : index
    %c0_51 = arith.constant 0 : index
    %c0_52 = arith.constant 0 : index
    %104 = vector.load %arg15[%c0_50, %c0_51, %c0_52] : memref<1x1x128xf32, #tpu.memory_space<vmem>>, vector<1x1x128xf32>
    %105 = vector.shape_cast %104 : vector<1x1x128xf32> to vector<1x128xf32>
    %106 = vector.broadcast %105 : vector<1x128xf32> to vector<16x128xf32>
    %107 = arith.addf %103, %106 : vector<16x128xf32>
    %108 = arith.addf %107, %78 : vector<16x128xf32>
    %c0_53 = arith.constant 0 : index
    %c0_54 = arith.constant 0 : index
    %c0_55 = arith.constant 0 : index
    %109 = vector.load %arg16[%c0_53, %c0_54, %c0_55] : memref<1x1x128xf32, #tpu.memory_space<vmem>>, vector<1x1x128xf32>
    %110 = vector.shape_cast %109 : vector<1x1x128xf32> to vector<1x128xf32>
    %c0_56 = arith.constant 0 : index
    %c0_57 = arith.constant 0 : index
    %c0_58 = arith.constant 0 : index
    %111 = vector.load %arg17[%c0_56, %c0_57, %c0_58] : memref<1x1x128xf32, #tpu.memory_space<vmem>>, vector<1x1x128xf32>
    %112 = vector.shape_cast %111 : vector<1x1x128xf32> to vector<1x128xf32>
    %cst_59 = arith.constant dense<0.000000e+00> : vector<16xf32>
    %113 = vector.multi_reduction <add>, %108, %cst_59 [1] : vector<16x128xf32> to vector<16xf32>
    %114 = vector.shape_cast %113 : vector<16xf32> to vector<16x1xf32>
    %cst_60 = arith.constant 1.280000e+02 : f32
    %115 = vector.broadcast %cst_60 : f32 to vector<16x1xf32>
    %116 = arith.divf %114, %115 : vector<16x1xf32>
    %117 = vector.broadcast %116 : vector<16x1xf32> to vector<16x128xf32>
    %118 = arith.subf %108, %117 : vector<16x128xf32>
    %119 = arith.mulf %118, %118 : vector<16x128xf32>
    %cst_61 = arith.constant dense<0.000000e+00> : vector<16xf32>
    %120 = vector.multi_reduction <add>, %119, %cst_61 [1] : vector<16x128xf32> to vector<16xf32>
    %121 = vector.shape_cast %120 : vector<16xf32> to vector<16x1xf32>
    %cst_62 = arith.constant 1.280000e+02 : f32
    %122 = vector.broadcast %cst_62 : f32 to vector<16x1xf32>
    %123 = arith.divf %121, %122 : vector<16x1xf32>
    %cst_63 = arith.constant 9.99999974E-6 : f32
    %124 = vector.broadcast %cst_63 : f32 to vector<16x1xf32>
    %125 = arith.addf %123, %124 : vector<16x1xf32>
    %126 = math.rsqrt %125 : vector<16x1xf32>
    %127 = vector.broadcast %126 : vector<16x1xf32> to vector<16x128xf32>
    %128 = arith.mulf %118, %127 : vector<16x128xf32>
    %129 = vector.broadcast %110 : vector<1x128xf32> to vector<16x128xf32>
    %130 = arith.mulf %128, %129 : vector<16x128xf32>
    %131 = vector.broadcast %112 : vector<1x128xf32> to vector<16x128xf32>
    %132 = arith.addf %130, %131 : vector<16x128xf32>
    %c0_64 = arith.constant 0 : index
    %c0_65 = arith.constant 0 : index
    %133 = vector.load %arg22[%c0_64, %c0_65] : memref<16x128xf32, #tpu.memory_space<vmem>>, vector<16x128xf32>
    tpu.vector_store %arg22[%c0_64, %c0_65], %132 {strides = array<i32>} : memref<16x128xf32, #tpu.memory_space<vmem>>, vector<16x128xf32>,
    %c1_i32 = arith.constant 1 : i32
    %134 = arith.cmpi eq, %arg0, %c1_i32 : i32
    %135 = arith.extui %134 : i1 to i32
    %c0_i32_66 = arith.constant 0 : i32
    %136 = arith.cmpi ne, %135, %c0_i32_66 : i32
    scf.if %136 {
      %c0_67 = arith.constant 0 : index
      %c0_68 = arith.constant 0 : index
      %137 = tpu.strided_load %arg22[%c0_67, %c0_68] {strides = array<i32: 8, 1>} : memref<16x128xf32, #tpu.memory_space<vmem>>, vector<2x128xf32>
      %c0_69 = arith.constant 0 : index
      %c0_70 = arith.constant 0 : index
      %138 = vector.load %arg21[%c0_69, %c0_70] : memref<2x128xf32, #tpu.memory_space<vmem>>, vector<2x128xf32>
      tpu.vector_store %arg21[%c0_69, %c0_70], %137 {strides = array<i32>} : memref<2x128xf32, #tpu.memory_space<vmem>>, vector<2x128xf32>,
      %c0_71 = arith.constant 0 : index
      %c0_72 = arith.constant 0 : index
      %139 = vector.load %arg18[%c0_71, %c0_72] : memref<128x128xf32, #tpu.memory_space<vmem>>, vector<128x128xf32>
      %cst_73 = arith.constant dense<0.000000e+00> : vector<2x128xf32>
      %140 = tpu.matmul %137, %139, %cst_73 {dimension_numbers = #tpu.dot_dimension_numbers<[1], [0], [0], [1], [0, 0, 1, 1], [], []>} : vector<2x128xf32>, vector<128x128xf32>, vector<2x128xf32> -> vector<2x128xf32>
      %c0_74 = arith.constant 0 : index
      %c0_75 = arith.constant 0 : index
      %141 = vector.load %arg19[%c0_74, %c0_75] : memref<1x128xf32, #tpu.memory_space<vmem>>, vector<1x128xf32>
      %142 = vector.broadcast %141 : vector<1x128xf32> to vector<2x128xf32>
      %143 = arith.addf %140, %142 : vector<2x128xf32>
      %c0_76 = arith.constant 0 : index
      %c0_77 = arith.constant 0 : index
      %144 = vector.load %arg20[%c0_76, %c0_77] : memref<2x128xf32, #tpu.memory_space<vmem>>, vector<2x128xf32>
      tpu.vector_store %arg20[%c0_76, %c0_77], %143 {strides = array<i32>} : memref<2x128xf32, #tpu.memory_space<vmem>>, vector<2x128xf32>,
    } else {
    }
    return
  }
  func.func @transform_0(%arg0: i32) -> (i32, i32) {
    %c0_i32 = arith.constant 0 : i32
    %c0_i32_0 = arith.constant 0 : i32
    %c0_i32_1 = arith.constant 0 : i32
    return %c0_i32, %c0_i32_0 : i32, i32
  }
  func.func @transform_1(%arg0: i32) -> (i32, i32) {
    %c0_i32 = arith.constant 0 : i32
    %c0_i32_0 = arith.constant 0 : i32
    %c0_i32_1 = arith.constant 0 : i32
    return %c0_i32, %c0_i32_0 : i32, i32
  }
  func.func @transform_2(%arg0: i32) -> (i32, i32) {
    %c0_i32 = arith.constant 0 : i32
    %c0_i32_0 = arith.constant 0 : i32
    %c0_i32_1 = arith.constant 0 : i32
    return %c0_i32, %c0_i32_0 : i32, i32
  }
  func.func @transform_3(%arg0: i32) -> (i32, i32) {
    %c0_i32 = arith.constant 0 : i32
    %c0_i32_0 = arith.constant 0 : i32
    %c0_i32_1 = arith.constant 0 : i32
    return %c0_i32, %c0_i32_0 : i32, i32
  }
  func.func @transform_4(%arg0: i32) -> (i32, i32) {
    %c0_i32 = arith.constant 0 : i32
    %c0_i32_0 = arith.constant 0 : i32
    %c0_i32_1 = arith.constant 0 : i32
    return %c0_i32, %c0_i32_0 : i32, i32
  }
  func.func @transform_5(%arg0: i32) -> (i32, i32, i32) {
    %c0_i32 = arith.constant 0 : i32
    %c0_i32_0 = arith.constant 0 : i32
    %c0_i32_1 = arith.constant 0 : i32
    return %arg0, %c0_i32, %c0_i32_0 : i32, i32, i32
  }
  func.func @transform_6(%arg0: i32) -> (i32, i32, i32) {
    %c0_i32 = arith.constant 0 : i32
    %c0_i32_0 = arith.constant 0 : i32
    %c0_i32_1 = arith.constant 0 : i32
    return %arg0, %c0_i32, %c0_i32_0 : i32, i32, i32
  }
  func.func @transform_7(%arg0: i32) -> (i32, i32, i32) {
    %c0_i32 = arith.constant 0 : i32
    %c0_i32_0 = arith.constant 0 : i32
    %c0_i32_1 = arith.constant 0 : i32
    return %arg0, %c0_i32, %c0_i32_0 : i32, i32, i32
  }
  func.func @transform_8(%arg0: i32) -> (i32, i32, i32) {
    %c0_i32 = arith.constant 0 : i32
    %c0_i32_0 = arith.constant 0 : i32
    %c0_i32_1 = arith.constant 0 : i32
    return %arg0, %c0_i32, %c0_i32_0 : i32, i32, i32
  }
  func.func @transform_9(%arg0: i32) -> (i32, i32, i32) {
    %c0_i32 = arith.constant 0 : i32
    %c0_i32_0 = arith.constant 0 : i32
    %c0_i32_1 = arith.constant 0 : i32
    return %arg0, %c0_i32, %c0_i32_0 : i32, i32, i32
  }
  func.func @transform_10(%arg0: i32) -> (i32, i32, i32) {
    %c0_i32 = arith.constant 0 : i32
    %c0_i32_0 = arith.constant 0 : i32
    %c0_i32_1 = arith.constant 0 : i32
    return %arg0, %c0_i32, %c0_i32_0 : i32, i32, i32
  }
  func.func @transform_11(%arg0: i32) -> (i32, i32, i32) {
    %c0_i32 = arith.constant 0 : i32
    %c0_i32_0 = arith.constant 0 : i32
    %c0_i32_1 = arith.constant 0 : i32
    return %arg0, %c0_i32, %c0_i32_0 : i32, i32, i32
  }
  func.func @transform_12(%arg0: i32) -> (i32, i32, i32) {
    %c0_i32 = arith.constant 0 : i32
    %c0_i32_0 = arith.constant 0 : i32
    %c0_i32_1 = arith.constant 0 : i32
    return %arg0, %c0_i32, %c0_i32_0 : i32, i32, i32
  }
  func.func @transform_13(%arg0: i32) -> (i32, i32, i32) {
    %c0_i32 = arith.constant 0 : i32
    %c0_i32_0 = arith.constant 0 : i32
    %c0_i32_1 = arith.constant 0 : i32
    return %arg0, %c0_i32, %c0_i32_0 : i32, i32, i32
  }
  func.func @transform_14(%arg0: i32) -> (i32, i32, i32) {
    %c0_i32 = arith.constant 0 : i32
    %c0_i32_0 = arith.constant 0 : i32
    %c0_i32_1 = arith.constant 0 : i32
    return %arg0, %c0_i32, %c0_i32_0 : i32, i32, i32
  }
  func.func @transform_15(%arg0: i32) -> (i32, i32, i32) {
    %c0_i32 = arith.constant 0 : i32
    %c0_i32_0 = arith.constant 0 : i32
    %c0_i32_1 = arith.constant 0 : i32
    return %arg0, %c0_i32, %c0_i32_0 : i32, i32, i32
  }
  func.func @transform_16(%arg0: i32) -> (i32, i32, i32) {
    %c0_i32 = arith.constant 0 : i32
    %c0_i32_0 = arith.constant 0 : i32
    %c0_i32_1 = arith.constant 0 : i32
    return %arg0, %c0_i32, %c0_i32_0 : i32, i32, i32
  }
  func.func @transform_17(%arg0: i32) -> (i32, i32) {
    %c0_i32 = arith.constant 0 : i32
    %c0_i32_0 = arith.constant 0 : i32
    %c0_i32_1 = arith.constant 0 : i32
    return %c0_i32, %c0_i32_0 : i32, i32
  }
  func.func @transform_18(%arg0: i32) -> (i32, i32) {
    %c0_i32 = arith.constant 0 : i32
    %c0_i32_0 = arith.constant 0 : i32
    %c0_i32_1 = arith.constant 0 : i32
    return %c0_i32, %c0_i32_0 : i32, i32
  }
  func.func @transform_19(%arg0: i32) -> (i32, i32) {
    %c0_i32 = arith.constant 0 : i32
    %c0_i32_0 = arith.constant 0 : i32
    %c0_i32_1 = arith.constant 0 : i32
    return %c0_i32, %c0_i32_0 : i32, i32
  }
  func.func @transform_20(%arg0: i32) -> (i32, i32) {
    %c0_i32 = arith.constant 0 : i32
    %c0_i32_0 = arith.constant 0 : i32
    %c0_i32_1 = arith.constant 0 : i32
    return %c0_i32, %c0_i32_0 : i32, i32
  }
}

</mosaic_0001>

<llo_original>
// kernel: roberta_linear_classifier.1
$region0: #{roberta_linear_classifier.1}
  #allocation0 [shape = 'u32[]', space=smem, size = 0x4, offset = 0x4, fixed_abs, tag = 'smem constant byte address 0x4 - core index']
  #allocation1 [shape = 'u32[144,128]{1,0:T(1,128)}', space=vmem, size = 0x12000, scoped, tag = 'internal scratch']
  #allocation2 [shape = 'f32[16,128]{1,0:T(8,128)}', space=vmem, size = 0x2000, scoped, tag = 'scratch operand']
  %s0 = inlined_call_operand.vmem [shape: f32[16,128], index: 0, kind: input, shape index: {}]
  %s1 = inlined_call_operand.vmem [shape: f32[1,128], index: 1, kind: input, shape index: {}]
  %s2 = inlined_call_operand.vmem [shape: f32[1,128], index: 2, kind: input, shape index: {}]
  %s3 = inlined_call_operand.vmem [shape: f32[16,64], index: 3, kind: input, shape index: {}]
  %s4 = inlined_call_operand.vmem [shape: bf16[64,128], index: 4, kind: input, shape index: {}]
  %s5 = inlined_call_operand.vmem [shape: bf16[2,128,384], index: 5, kind: input, shape index: {}]
  %s6 = inlined_call_operand.vmem [shape: f32[2,1,384], index: 6, kind: input, shape index: {}]
  %s7 = inlined_call_operand.vmem [shape: bf16[2,128,128], index: 7, kind: input, shape index: {}]
  %s8 = inlined_call_operand.vmem [shape: f32[2,1,128], index: 8, kind: input, shape index: {}]
  %s9 = inlined_call_operand.vmem [shape: f32[2,1,128], index: 9, kind: input, shape index: {}]
  %s10 = inlined_call_operand.vmem [shape: f32[2,1,128], index: 10, kind: input, shape index: {}]
  %s11 = inlined_call_operand.vmem [shape: bf16[2,128,256], index: 11, kind: input, shape index: {}]
  %s12 = inlined_call_operand.vmem [shape: f32[2,1,256], index: 12, kind: input, shape index: {}]
  %s13 = inlined_call_operand.vmem [shape: bf16[2,256,128], index: 13, kind: input, shape index: {}]
  %s14 = inlined_call_operand.vmem [shape: f32[2,1,128], index: 14, kind: input, shape index: {}]
  %s15 = inlined_call_operand.vmem [shape: f32[2,1,128], index: 15, kind: input, shape index: {}]
  %s16 = inlined_call_operand.vmem [shape: f32[2,1,128], index: 16, kind: input, shape index: {}]
  %s17 = inlined_call_operand.vmem [shape: f32[128,128], index: 17, kind: input, shape index: {}]
  %s18 = inlined_call_operand.vmem [shape: f32[1,128], index: 18, kind: input, shape index: {}]
  %s19 = inlined_call_operand.hbm [shape: f32[2,128], index: 19, kind: output, shape index: {0}]
  %s20 = inlined_call_operand.hbm [shape: f32[2,128], index: 20, kind: output, shape index: {1}]
  %21 = xla_tuple %s19, %s20
  %s22 = sld [smem:[#allocation0]]
  $region125: #{roberta_linear_classifier.1} parent=0
    _
  %s24 = ssub.s32 1, %s22
  %s25 = scalar_select 0, %s24, %s22
  $region1: #{roberta_linear_classifier.1} parent=0
    #allocation3 [shape = 'u8[1024]{0}', space=vmem, size = 0x400, scoped, tag = 'output window, operand 0, single buffered']
    #allocation4 [shape = 's32[2]{0}', space=sflag, size = 0x8, scoped, tag = 'scoped memory for roberta_linear_classifier.1']
    #allocation5 [shape = 'u8[1024]{0}', space=vmem, size = 0x400, scoped, tag = 'output window, operand 1, single buffered']
    #allocation6 [shape = 's32[1]{0}', space=sflag, size = 0x4, scoped, tag = 'scoped memory for roberta_linear_classifier.1']
    %26 = vsyncpa [#allocation4], 0
    %27 = vsyncpa [#allocation6], 0
    loop: start=0, step=1, limit=4
    $region2: #{roberta_linear_classifier.1} parent=1 // loop_pre_header
      _
    $region3: #{roberta_linear_classifier.1} parent=1 // loop_header
      %s29 = sphi 0, %s33
      %p30 = scmp.ge.s32.totalorder %s29, 4
      %s37 = sphi 0, %s37
      %s39 = sphi 0, %s37
      %s40 = sphi 0, %s39
      %s54 = sphi 0, %s40
      %s58 = sphi 0, %s58
      %s60 = sphi 0, %s58
      %s61 = sphi 0, %s60
      %s75 = sphi 0, %s61
      %s79 = sphi 0, %s79
      %s81 = sphi 0, %s79
      %s82 = sphi 0, %s81
      %s96 = sphi 0, %s82
      %s100 = sphi 0, %s100
      %s102 = sphi 0, %s100
      %s103 = sphi 0, %s102
      %s117 = sphi 0, %s103
      %s121 = sphi 0, %s121
      %s123 = sphi 0, %s121
      %s124 = sphi 0, %s123
      %s138 = sphi 0, %s124
      %s144 = sphi 0, %s146
      %s147 = sphi 0, %s144
      %s148 = sphi 0, %s147
      %s164 = sphi 0, %s148
      %s170 = sphi 0, %s172
      %s173 = sphi 0, %s170
      %s174 = sphi 0, %s173
      %s190 = sphi 0, %s174
      %s196 = sphi 0, %s198
      %s199 = sphi 0, %s196
      %s200 = sphi 0, %s199
      %s216 = sphi 0, %s200
      %s222 = sphi 0, %s224
      %s225 = sphi 0, %s222
      %s226 = sphi 0, %s225
      %s242 = sphi 0, %s226
      %s248 = sphi 0, %s250
      %s251 = sphi 0, %s248
      %s252 = sphi 0, %s251
      %s268 = sphi 0, %s252
      %s274 = sphi 0, %s276
      %s277 = sphi 0, %s274
      %s278 = sphi 0, %s277
      %s294 = sphi 0, %s278
      %s300 = sphi 0, %s302
      %s303 = sphi 0, %s300
      %s304 = sphi 0, %s303
      %s320 = sphi 0, %s304
      %s326 = sphi 0, %s328
      %s329 = sphi 0, %s326
      %s330 = sphi 0, %s329
      %s346 = sphi 0, %s330
      %s352 = sphi 0, %s354
      %s355 = sphi 0, %s352
      %s356 = sphi 0, %s355
      %s372 = sphi 0, %s356
      %s378 = sphi 0, %s380
      %s381 = sphi 0, %s378
      %s382 = sphi 0, %s381
      %s398 = sphi 0, %s382
      %s404 = sphi 0, %s406
      %s407 = sphi 0, %s404
      %s408 = sphi 0, %s407
      %s424 = sphi 0, %s408
      %s430 = sphi 0, %s432
      %s433 = sphi 0, %s430
      %s434 = sphi 0, %s433
      %s450 = sphi 0, %s434
      %s454 = sphi 0, %s454
      %s456 = sphi 0, %s454
      %s457 = sphi 0, %s456
      %s471 = sphi 0, %s457
      %s475 = sphi 0, %s475
      %s477 = sphi 0, %s475
      %s478 = sphi 0, %s477
      %s492 = sphi 0, %s478
      %s496 = sphi 0, %s496
      %s498 = sphi 0, %s496
      %s499 = sphi 0, %s498
      %s513 = sphi 0, %s499
      %s517 = sphi 0, %s517
      %s519 = sphi 0, %s517
      %s520 = sphi 0, %s519
      %s534 = sphi 0, %s520
    $region4: #{roberta_linear_classifier.1} parent=1 // loop_header_branch
      %32 = sbr.rel (%p30) target = $region8
    $region5: #{roberta_linear_classifier.1} parent=1 // loop_body
      %s34 = ssub.s32 %s29, 1
      %s35 = ssub.s32 %s29, 2
      %s36 = sadd.s32 %s29, 1
      %s38 = sadd.s32 %s37, 1
      %p41 = scmp.eq.s32.totalorder %s29, 1
      %p42 = scmp.ne.s32.totalorder %s37, %s39
      %p43 = scmp.eq.s32.totalorder %s29, 0
      %p44 = por %p42, %p43
      %p45 = scmp.ne.s32.totalorder %s37, %s39
      %p46 = scmp.eq.s32.totalorder %s34, 1
      %p47 = por %p45, %p46
      %p48 = scmp.ne.s32.totalorder %s39, %s40
      %p49 = scmp.eq.s32.totalorder %s34, 0
      %p50 = por %p48, %p49
      %p51 = scmp.ne.s32.totalorder %s39, %s40
      %p52 = scmp.eq.s32.totalorder %s35, 1
      %p53 = por %p51, %p52
      %p55 = scmp.ne.s32.totalorder %s40, %s54
      %p56 = scmp.eq.s32.totalorder %s35, 0
      %p57 = por %p55, %p56
      %s59 = sadd.s32 %s58, 1
      %p62 = scmp.eq.s32.totalorder %s29, 1
      %p63 = scmp.ne.s32.totalorder %s58, %s60
      %p64 = scmp.eq.s32.totalorder %s29, 0
      %p65 = por %p63, %p64
      %p66 = scmp.ne.s32.totalorder %s58, %s60
      %p67 = scmp.eq.s32.totalorder %s34, 1
      %p68 = por %p66, %p67
      %p69 = scmp.ne.s32.totalorder %s60, %s61
      %p70 = scmp.eq.s32.totalorder %s34, 0
      %p71 = por %p69, %p70
      %p72 = scmp.ne.s32.totalorder %s60, %s61
      %p73 = scmp.eq.s32.totalorder %s35, 1
      %p74 = por %p72, %p73
      %p76 = scmp.ne.s32.totalorder %s61, %s75
      %p77 = scmp.eq.s32.totalorder %s35, 0
      %p78 = por %p76, %p77
      %s80 = sadd.s32 %s79, 1
      %p83 = scmp.eq.s32.totalorder %s29, 1
      %p84 = scmp.ne.s32.totalorder %s79, %s81
      %p85 = scmp.eq.s32.totalorder %s29, 0
      %p86 = por %p84, %p85
      %p87 = scmp.ne.s32.totalorder %s79, %s81
      %p88 = scmp.eq.s32.totalorder %s34, 1
      %p89 = por %p87, %p88
      %p90 = scmp.ne.s32.totalorder %s81, %s82
      %p91 = scmp.eq.s32.totalorder %s34, 0
      %p92 = por %p90, %p91
      %p93 = scmp.ne.s32.totalorder %s81, %s82
      %p94 = scmp.eq.s32.totalorder %s35, 1
      %p95 = por %p93, %p94
      %p97 = scmp.ne.s32.totalorder %s82, %s96
      %p98 = scmp.eq.s32.totalorder %s35, 0
      %p99 = por %p97, %p98
      %s101 = sadd.s32 %s100, 1
      %p104 = scmp.eq.s32.totalorder %s29, 1
      %p105 = scmp.ne.s32.totalorder %s100, %s102
      %p106 = scmp.eq.s32.totalorder %s29, 0
      %p107 = por %p105, %p106
      %p108 = scmp.ne.s32.totalorder %s100, %s102
      %p109 = scmp.eq.s32.totalorder %s34, 1
      %p110 = por %p108, %p109
      %p111 = scmp.ne.s32.totalorder %s102, %s103
      %p112 = scmp.eq.s32.totalorder %s34, 0
      %p113 = por %p111, %p112
      %p114 = scmp.ne.s32.totalorder %s102, %s103
      %p115 = scmp.eq.s32.totalorder %s35, 1
      %p116 = por %p114, %p115
      %p118 = scmp.ne.s32.totalorder %s103, %s117
      %p119 = scmp.eq.s32.totalorder %s35, 0
      %p120 = por %p118, %p119
      %s122 = sadd.s32 %s121, 1
      %p125 = scmp.eq.s32.totalorder %s29, 1
      %p126 = scmp.ne.s32.totalorder %s121, %s123
      %p127 = scmp.eq.s32.totalorder %s29, 0
      %p128 = por %p126, %p127
      %p129 = scmp.ne.s32.totalorder %s121, %s123
      %p130 = scmp.eq.s32.totalorder %s34, 1
      %p131 = por %p129, %p130
      %p132 = scmp.ne.s32.totalorder %s123, %s124
      %p133 = scmp.eq.s32.totalorder %s34, 0
      %p134 = por %p132, %p133
      %p135 = scmp.ne.s32.totalorder %s123, %s124
      %p136 = scmp.eq.s32.totalorder %s35, 1
      %p137 = por %p135, %p136
      %p139 = scmp.ne.s32.totalorder %s124, %s138
      %p140 = scmp.eq.s32.totalorder %s35, 0
      %p141 = por %p139, %p140
      %s142 = ssub.s32 %s29, %s36
      %p143 = scmp.eq.s32.totalorder %s142, 0
      %s145 = sadd.s32 %s144, 1
      %s146 = scalar_select %p143, %s144, %s145
      %p149 = pneg %p143
      %p150 = scmp.eq.s32.totalorder %s29, 1
      %p151 = por %p149, %p150
      %p152 = scmp.ne.s32.totalorder %s144, %s147
      %p153 = scmp.eq.s32.totalorder %s29, 0
      %p154 = por %p152, %p153
      %p155 = scmp.ne.s32.totalorder %s144, %s147
      %p156 = scmp.eq.s32.totalorder %s34, 1
      %p157 = por %p155, %p156
      %p158 = scmp.ne.s32.totalorder %s147, %s148
      %p159 = scmp.eq.s32.totalorder %s34, 0
      %p160 = por %p158, %p159
      %p161 = scmp.ne.s32.totalorder %s147, %s148
      %p162 = scmp.eq.s32.totalorder %s35, 1
      %p163 = por %p161, %p162
      %p165 = scmp.ne.s32.totalorder %s148, %s164
      %p166 = scmp.eq.s32.totalorder %s35, 0
      %p167 = por %p165, %p166
      %s168 = ssub.s32 %s29, %s36
      %p169 = scmp.eq.s32.totalorder %s168, 0
      %s171 = sadd.s32 %s170, 1
      %s172 = scalar_select %p169, %s170, %s171
      %p175 = pneg %p169
      %p176 = scmp.eq.s32.totalorder %s29, 1
      %p177 = por %p175, %p176
      %p178 = scmp.ne.s32.totalorder %s170, %s173
      %p179 = scmp.eq.s32.totalorder %s29, 0
      %p180 = por %p178, %p179
      %p181 = scmp.ne.s32.totalorder %s170, %s173
      %p182 = scmp.eq.s32.totalorder %s34, 1
      %p183 = por %p181, %p182
      %p184 = scmp.ne.s32.totalorder %s173, %s174
      %p185 = scmp.eq.s32.totalorder %s34, 0
      %p186 = por %p184, %p185
      %p187 = scmp.ne.s32.totalorder %s173, %s174
      %p188 = scmp.eq.s32.totalorder %s35, 1
      %p189 = por %p187, %p188
      %p191 = scmp.ne.s32.totalorder %s174, %s190
      %p192 = scmp.eq.s32.totalorder %s35, 0
      %p193 = por %p191, %p192
      %s194 = ssub.s32 %s29, %s36
      %p195 = scmp.eq.s32.totalorder %s194, 0
      %s197 = sadd.s32 %s196, 1
      %s198 = scalar_select %p195, %s196, %s197
      %p201 = pneg %p195
      %p202 = scmp.eq.s32.totalorder %s29, 1
      %p203 = por %p201, %p202
      %p204 = scmp.ne.s32.totalorder %s196, %s199
      %p205 = scmp.eq.s32.totalorder %s29, 0
      %p206 = por %p204, %p205
      %p207 = scmp.ne.s32.totalorder %s196, %s199
      %p208 = scmp.eq.s32.totalorder %s34, 1
      %p209 = por %p207, %p208
      %p210 = scmp.ne.s32.totalorder %s199, %s200
      %p211 = scmp.eq.s32.totalorder %s34, 0
      %p212 = por %p210, %p211
      %p213 = scmp.ne.s32.totalorder %s199, %s200
      %p214 = scmp.eq.s32.totalorder %s35, 1
      %p215 = por %p213, %p214
      %p217 = scmp.ne.s32.totalorder %s200, %s216
      %p218 = scmp.eq.s32.totalorder %s35, 0
      %p219 = por %p217, %p218
      %s220 = ssub.s32 %s29, %s36
      %p221 = scmp.eq.s32.totalorder %s220, 0
      %s223 = sadd.s32 %s222, 1
      %s224 = scalar_select %p221, %s222, %s223
      %p227 = pneg %p221
      %p228 = scmp.eq.s32.totalorder %s29, 1
      %p229 = por %p227, %p228
      %p230 = scmp.ne.s32.totalorder %s222, %s225
      %p231 = scmp.eq.s32.totalorder %s29, 0
      %p232 = por %p230, %p231
      %p233 = scmp.ne.s32.totalorder %s222, %s225
      %p234 = scmp.eq.s32.totalorder %s34, 1
      %p235 = por %p233, %p234
      %p236 = scmp.ne.s32.totalorder %s225, %s226
      %p237 = scmp.eq.s32.totalorder %s34, 0
      %p238 = por %p236, %p237
      %p239 = scmp.ne.s32.totalorder %s225, %s226
      %p240 = scmp.eq.s32.totalorder %s35, 1
      %p241 = por %p239, %p240
      %p243 = scmp.ne.s32.totalorder %s226, %s242
      %p244 = scmp.eq.s32.totalorder %s35, 0
      %p245 = por %p243, %p244
      %s246 = ssub.s32 %s29, %s36
      %p247 = scmp.eq.s32.totalorder %s246, 0
      %s249 = sadd.s32 %s248, 1
      %s250 = scalar_select %p247, %s248, %s249
      %p253 = pneg %p247
      %p254 = scmp.eq.s32.totalorder %s29, 1
      %p255 = por %p253, %p254
      %p256 = scmp.ne.s32.totalorder %s248, %s251
      %p257 = scmp.eq.s32.totalorder %s29, 0
      %p258 = por %p256, %p257
      %p259 = scmp.ne.s32.totalorder %s248, %s251
      %p260 = scmp.eq.s32.totalorder %s34, 1
      %p261 = por %p259, %p260
      %p262 = scmp.ne.s32.totalorder %s251, %s252
      %p263 = scmp.eq.s32.totalorder %s34, 0
      %p264 = por %p262, %p263
      %p265 = scmp.ne.s32.totalorder %s251, %s252
      %p266 = scmp.eq.s32.totalorder %s35, 1
      %p267 = por %p265, %p266
      %p269 = scmp.ne.s32.totalorder %s252, %s268
      %p270 = scmp.eq.s32.totalorder %s35, 0
      %p271 = por %p269, %p270
      %s272 = ssub.s32 %s29, %s36
      %p273 = scmp.eq.s32.totalorder %s272, 0
      %s275 = sadd.s32 %s274, 1
      %s276 = scalar_select %p273, %s274, %s275
      %p279 = pneg %p273
      %p280 = scmp.eq.s32.totalorder %s29, 1
      %p281 = por %p279, %p280
      %p282 = scmp.ne.s32.totalorder %s274, %s277
      %p283 = scmp.eq.s32.totalorder %s29, 0
      %p284 = por %p282, %p283
      %p285 = scmp.ne.s32.totalorder %s274, %s277
      %p286 = scmp.eq.s32.totalorder %s34, 1
      %p287 = por %p285, %p286
      %p288 = scmp.ne.s32.totalorder %s277, %s278
      %p289 = scmp.eq.s32.totalorder %s34, 0
      %p290 = por %p288, %p289
      %p291 = scmp.ne.s32.totalorder %s277, %s278
      %p292 = scmp.eq.s32.totalorder %s35, 1
      %p293 = por %p291, %p292
      %p295 = scmp.ne.s32.totalorder %s278, %s294
      %p296 = scmp.eq.s32.totalorder %s35, 0
      %p297 = por %p295, %p296
      %s298 = ssub.s32 %s29, %s36
      %p299 = scmp.eq.s32.totalorder %s298, 0
      %s301 = sadd.s32 %s300, 1
      %s302 = scalar_select %p299, %s300, %s301
      %p305 = pneg %p299
      %p306 = scmp.eq.s32.totalorder %s29, 1
      %p307 = por %p305, %p306
      %p308 = scmp.ne.s32.totalorder %s300, %s303
      %p309 = scmp.eq.s32.totalorder %s29, 0
      %p310 = por %p308, %p309
      %p311 = scmp.ne.s32.totalorder %s300, %s303
      %p312 = scmp.eq.s32.totalorder %s34, 1
      %p313 = por %p311, %p312
      %p314 = scmp.ne.s32.totalorder %s303, %s304
      %p315 = scmp.eq.s32.totalorder %s34, 0
      %p316 = por %p314, %p315
      %p317 = scmp.ne.s32.totalorder %s303, %s304
      %p318 = scmp.eq.s32.totalorder %s35, 1
      %p319 = por %p317, %p318
      %p321 = scmp.ne.s32.totalorder %s304, %s320
      %p322 = scmp.eq.s32.totalorder %s35, 0
      %p323 = por %p321, %p322
      %s324 = ssub.s32 %s29, %s36
      %p325 = scmp.eq.s32.totalorder %s324, 0
      %s327 = sadd.s32 %s326, 1
      %s328 = scalar_select %p325, %s326, %s327
      %p331 = pneg %p325
      %p332 = scmp.eq.s32.totalorder %s29, 1
      %p333 = por %p331, %p332
      %p334 = scmp.ne.s32.totalorder %s326, %s329
      %p335 = scmp.eq.s32.totalorder %s29, 0
      %p336 = por %p334, %p335
      %p337 = scmp.ne.s32.totalorder %s326, %s329
      %p338 = scmp.eq.s32.totalorder %s34, 1
      %p339 = por %p337, %p338
      %p340 = scmp.ne.s32.totalorder %s329, %s330
      %p341 = scmp.eq.s32.totalorder %s34, 0
      %p342 = por %p340, %p341
      %p343 = scmp.ne.s32.totalorder %s329, %s330
      %p344 = scmp.eq.s32.totalorder %s35, 1
      %p345 = por %p343, %p344
      %p347 = scmp.ne.s32.totalorder %s330, %s346
      %p348 = scmp.eq.s32.totalorder %s35, 0
      %p349 = por %p347, %p348
      %s350 = ssub.s32 %s29, %s36
      %p351 = scmp.eq.s32.totalorder %s350, 0
      %s353 = sadd.s32 %s352, 1
      %s354 = scalar_select %p351, %s352, %s353
      %p357 = pneg %p351
      %p358 = scmp.eq.s32.totalorder %s29, 1
      %p359 = por %p357, %p358
      %p360 = scmp.ne.s32.totalorder %s352, %s355
      %p361 = scmp.eq.s32.totalorder %s29, 0
      %p362 = por %p360, %p361
      %p363 = scmp.ne.s32.totalorder %s352, %s355
      %p364 = scmp.eq.s32.totalorder %s34, 1
      %p365 = por %p363, %p364
      %p366 = scmp.ne.s32.totalorder %s355, %s356
      %p367 = scmp.eq.s32.totalorder %s34, 0
      %p368 = por %p366, %p367
      %p369 = scmp.ne.s32.totalorder %s355, %s356
      %p370 = scmp.eq.s32.totalorder %s35, 1
      %p371 = por %p369, %p370
      %p373 = scmp.ne.s32.totalorder %s356, %s372
      %p374 = scmp.eq.s32.totalorder %s35, 0
      %p375 = por %p373, %p374
      %s376 = ssub.s32 %s29, %s36
      %p377 = scmp.eq.s32.totalorder %s376, 0
      %s379 = sadd.s32 %s378, 1
      %s380 = scalar_select %p377, %s378, %s379
      %p383 = pneg %p377
      %p384 = scmp.eq.s32.totalorder %s29, 1
      %p385 = por %p383, %p384
      %p386 = scmp.ne.s32.totalorder %s378, %s381
      %p387 = scmp.eq.s32.totalorder %s29, 0
      %p388 = por %p386, %p387
      %p389 = scmp.ne.s32.totalorder %s378, %s381
      %p390 = scmp.eq.s32.totalorder %s34, 1
      %p391 = por %p389, %p390
      %p392 = scmp.ne.s32.totalorder %s381, %s382
      %p393 = scmp.eq.s32.totalorder %s34, 0
      %p394 = por %p392, %p393
      %p395 = scmp.ne.s32.totalorder %s381, %s382
      %p396 = scmp.eq.s32.totalorder %s35, 1
      %p397 = por %p395, %p396
      %p399 = scmp.ne.s32.totalorder %s382, %s398
      %p400 = scmp.eq.s32.totalorder %s35, 0
      %p401 = por %p399, %p400
      %s402 = ssub.s32 %s29, %s36
      %p403 = scmp.eq.s32.totalorder %s402, 0
      %s405 = sadd.s32 %s404, 1
      %s406 = scalar_select %p403, %s404, %s405
      %p409 = pneg %p403
      %p410 = scmp.eq.s32.totalorder %s29, 1
      %p411 = por %p409, %p410
      %p412 = scmp.ne.s32.totalorder %s404, %s407
      %p413 = scmp.eq.s32.totalorder %s29, 0
      %p414 = por %p412, %p413
      %p415 = scmp.ne.s32.totalorder %s404, %s407
      %p416 = scmp.eq.s32.totalorder %s34, 1
      %p417 = por %p415, %p416
      %p418 = scmp.ne.s32.totalorder %s407, %s408
      %p419 = scmp.eq.s32.totalorder %s34, 0
      %p420 = por %p418, %p419
      %p421 = scmp.ne.s32.totalorder %s407, %s408
      %p422 = scmp.eq.s32.totalorder %s35, 1
      %p423 = por %p421, %p422
      %p425 = scmp.ne.s32.totalorder %s408, %s424
      %p426 = scmp.eq.s32.totalorder %s35, 0
      %p427 = por %p425, %p426
      %s428 = ssub.s32 %s29, %s36
      %p429 = scmp.eq.s32.totalorder %s428, 0
      %s431 = sadd.s32 %s430, 1
      %s432 = scalar_select %p429, %s430, %s431
      %p435 = pneg %p429
      %p436 = scmp.eq.s32.totalorder %s29, 1
      %p437 = por %p435, %p436
      %p438 = scmp.ne.s32.totalorder %s430, %s433
      %p439 = scmp.eq.s32.totalorder %s29, 0
      %p440 = por %p438, %p439
      %p441 = scmp.ne.s32.totalorder %s430, %s433
      %p442 = scmp.eq.s32.totalorder %s34, 1
      %p443 = por %p441, %p442
      %p444 = scmp.ne.s32.totalorder %s433, %s434
      %p445 = scmp.eq.s32.totalorder %s34, 0
      %p446 = por %p444, %p445
      %p447 = scmp.ne.s32.totalorder %s433, %s434
      %p448 = scmp.eq.s32.totalorder %s35, 1
      %p449 = por %p447, %p448
      %p451 = scmp.ne.s32.totalorder %s434, %s450
      %p452 = scmp.eq.s32.totalorder %s35, 0
      %p453 = por %p451, %p452
      %s455 = sadd.s32 %s454, 1
      %p458 = scmp.eq.s32.totalorder %s29, 1
      %p459 = scmp.ne.s32.totalorder %s454, %s456
      %p460 = scmp.eq.s32.totalorder %s29, 0
      %p461 = por %p459, %p460
      %p462 = scmp.ne.s32.totalorder %s454, %s456
      %p463 = scmp.eq.s32.totalorder %s34, 1
      %p464 = por %p462, %p463
      %p465 = scmp.ne.s32.totalorder %s456, %s457
      %p466 = scmp.eq.s32.totalorder %s34, 0
      %p467 = por %p465, %p466
      %p468 = scmp.ne.s32.totalorder %s456, %s457
      %p469 = scmp.eq.s32.totalorder %s35, 1
      %p470 = por %p468, %p469
      %p472 = scmp.ne.s32.totalorder %s457, %s471
      %p473 = scmp.eq.s32.totalorder %s35, 0
      %p474 = por %p472, %p473
      %s476 = sadd.s32 %s475, 1
      %p479 = scmp.eq.s32.totalorder %s29, 1
      %p480 = scmp.ne.s32.totalorder %s475, %s477
      %p481 = scmp.eq.s32.totalorder %s29, 0
      %p482 = por %p480, %p481
      %p483 = scmp.ne.s32.totalorder %s475, %s477
      %p484 = scmp.eq.s32.totalorder %s34, 1
      %p485 = por %p483, %p484
      %p486 = scmp.ne.s32.totalorder %s477, %s478
      %p487 = scmp.eq.s32.totalorder %s34, 0
      %p488 = por %p486, %p487
      %p489 = scmp.ne.s32.totalorder %s477, %s478
      %p490 = scmp.eq.s32.totalorder %s35, 1
      %p491 = por %p489, %p490
      %p493 = scmp.ne.s32.totalorder %s478, %s492
      %p494 = scmp.eq.s32.totalorder %s35, 0
      %p495 = por %p493, %p494
      %s497 = sadd.s32 %s496, 1
      %p500 = scmp.eq.s32.totalorder %s29, 1
      %p501 = scmp.ne.s32.totalorder %s496, %s498
      %p502 = scmp.eq.s32.totalorder %s29, 0
      %p503 = por %p501, %p502
      %p504 = scmp.ne.s32.totalorder %s496, %s498
      %p505 = scmp.eq.s32.totalorder %s34, 1
      %p506 = por %p504, %p505
      %p507 = scmp.ne.s32.totalorder %s498, %s499
      %p508 = scmp.eq.s32.totalorder %s34, 0
      %p509 = por %p507, %p508
      %p510 = scmp.ne.s32.totalorder %s498, %s499
      %p511 = scmp.eq.s32.totalorder %s35, 1
      %p512 = por %p510, %p511
      %p514 = scmp.ne.s32.totalorder %s499, %s513
      %p515 = scmp.eq.s32.totalorder %s35, 0
      %p516 = por %p514, %p515
      %s518 = sadd.s32 %s517, 1
      %p521 = scmp.eq.s32.totalorder %s29, 1
      %p522 = scmp.ne.s32.totalorder %s517, %s519
      %p523 = scmp.eq.s32.totalorder %s29, 0
      %p524 = por %p522, %p523
      %p525 = scmp.ne.s32.totalorder %s517, %s519
      %p526 = scmp.eq.s32.totalorder %s34, 1
      %p527 = por %p525, %p526
      %p528 = scmp.ne.s32.totalorder %s519, %s520
      %p529 = scmp.eq.s32.totalorder %s34, 0
      %p530 = por %p528, %p529
      %p531 = scmp.ne.s32.totalorder %s519, %s520
      %p532 = scmp.eq.s32.totalorder %s35, 1
      %p533 = por %p531, %p532
      %p535 = scmp.ne.s32.totalorder %s520, %s534
      %p536 = scmp.eq.s32.totalorder %s35, 0
      %p537 = por %p535, %p536
      %p538 = scmp.le.s32.totalorder 1, %s29
      %p539 = scmp.lt.s32.totalorder %s29, 3
      %p540 = pnand %p538, %p539
      %p541 = pneg %p540
      // Predicated region
      $region9: #{roberta_linear_classifier.1} parent=5 // pred_check
        _
      $region10: #{roberta_linear_classifier.1} parent=5 // pred_check_branch
        %543 = sbr.rel (%p540) target = $region12
      $region11: #{roberta_linear_classifier.1} parent=5 // pred_region
        %s544 = ssub.s32 %s29, 1
        // Predicated region
        $region13: #{roberta_linear_classifier.1} parent=11 // pred_check
          %p545 = pneg %p50
        $region14: #{roberta_linear_classifier.1} parent=11 // pred_check_branch
          %547 = sbr.rel (%p545) target = $region16
        $region15: #{roberta_linear_classifier.1} parent=11 // pred_region
          _
        $region16: #{roberta_linear_classifier.1} parent=11 // pred_fallthru
          _
        // Predicated region
        $region17: #{roberta_linear_classifier.1} parent=11 // pred_check
          %p548 = pneg %p71
        $region18: #{roberta_linear_classifier.1} parent=11 // pred_check_branch
          %550 = sbr.rel (%p548) target = $region20
        $region19: #{roberta_linear_classifier.1} parent=11 // pred_region
          _
        $region20: #{roberta_linear_classifier.1} parent=11 // pred_fallthru
          _
        // Predicated region
        $region21: #{roberta_linear_classifier.1} parent=11 // pred_check
          %p551 = pneg %p92
        $region22: #{roberta_linear_classifier.1} parent=11 // pred_check_branch
          %553 = sbr.rel (%p551) target = $region24
        $region23: #{roberta_linear_classifier.1} parent=11 // pred_region
          _
        $region24: #{roberta_linear_classifier.1} parent=11 // pred_fallthru
          _
        // Predicated region
        $region25: #{roberta_linear_classifier.1} parent=11 // pred_check
          %p554 = pneg %p113
        $region26: #{roberta_linear_classifier.1} parent=11 // pred_check_branch
          %556 = sbr.rel (%p554) target = $region28
        $region27: #{roberta_linear_classifier.1} parent=11 // pred_region
          _
        $region28: #{roberta_linear_classifier.1} parent=11 // pred_fallthru
          _
        // Predicated region
        $region29: #{roberta_linear_classifier.1} parent=11 // pred_check
          %p557 = pneg %p134
        $region30: #{roberta_linear_classifier.1} parent=11 // pred_check_branch
          %559 = sbr.rel (%p557) target = $region32
        $region31: #{roberta_linear_classifier.1} parent=11 // pred_region
          _
        $region32: #{roberta_linear_classifier.1} parent=11 // pred_fallthru
          _
        // Predicated region
        $region33: #{roberta_linear_classifier.1} parent=11 // pred_check
          %p560 = pneg %p467
        $region34: #{roberta_linear_classifier.1} parent=11 // pred_check_branch
          %562 = sbr.rel (%p560) target = $region36
        $region35: #{roberta_linear_classifier.1} parent=11 // pred_region
          _
        $region36: #{roberta_linear_classifier.1} parent=11 // pred_fallthru
          _
        // Predicated region
        $region37: #{roberta_linear_classifier.1} parent=11 // pred_check
          %p563 = pneg %p488
        $region38: #{roberta_linear_classifier.1} parent=11 // pred_check_branch
          %565 = sbr.rel (%p563) target = $region40
        $region39: #{roberta_linear_classifier.1} parent=11 // pred_region
          _
        $region40: #{roberta_linear_classifier.1} parent=11 // pred_fallthru
          _
      $region12: #{roberta_linear_classifier.1} parent=5 // pred_fallthru
        _
      %p566 = scmp.lt.s32.totalorder %s29, 2
      // Predicated region
      $region41: #{roberta_linear_classifier.1} parent=5 // pred_check
        %p567 = pneg %p566
      $region42: #{roberta_linear_classifier.1} parent=5 // pred_check_branch
        %569 = sbr.rel (%p567) target = $region44
      $region43: #{roberta_linear_classifier.1} parent=5 // pred_region
        // Predicated region
        $region45: #{roberta_linear_classifier.1} parent=43 // pred_check
          %p570 = pneg %p154
        $region46: #{roberta_linear_classifier.1} parent=43 // pred_check_branch
          %572 = sbr.rel (%p570) target = $region48
        $region47: #{roberta_linear_classifier.1} parent=43 // pred_region
          %p573 = scmp.lt.s32.totalorder %s29, 1
          %s574 = scalar_select %p573, %s29, 1
          %s575 = smul.addr %s574, 48
          %s576 = smul.addr %s575, 4
          %s577 = scalar_lea.vmem %s5, %s576
        $region48: #{roberta_linear_classifier.1} parent=43 // pred_fallthru
          _
        // Predicated region
        $region49: #{roberta_linear_classifier.1} parent=43 // pred_check
          %p578 = pneg %p180
        $region50: #{roberta_linear_classifier.1} parent=43 // pred_check_branch
          %580 = sbr.rel (%p578) target = $region52
        $region51: #{roberta_linear_classifier.1} parent=43 // pred_region
          %p581 = scmp.lt.s32.totalorder %s29, 1
          %s582 = scalar_select %p581, %s29, 1
          %s583 = smul.addr %s582, 3
          %s584 = scalar_lea.vmem %s6, %s583
        $region52: #{roberta_linear_classifier.1} parent=43 // pred_fallthru
          _
        // Predicated region
        $region53: #{roberta_linear_classifier.1} parent=43 // pred_check
          %p585 = pneg %p206
        $region54: #{roberta_linear_classifier.1} parent=43 // pred_check_branch
          %587 = sbr.rel (%p585) target = $region56
        $region55: #{roberta_linear_classifier.1} parent=43 // pred_region
          %p588 = scmp.lt.s32.totalorder %s29, 1
          %s589 = scalar_select %p588, %s29, 1
          %s590 = smul.addr %s589, 16
          %s591 = smul.addr %s590, 4
          %s592 = scalar_lea.vmem %s7, %s591
        $region56: #{roberta_linear_classifier.1} parent=43 // pred_fallthru
          _
        // Predicated region
        $region57: #{roberta_linear_classifier.1} parent=43 // pred_check
          %p593 = pneg %p232
        $region58: #{roberta_linear_classifier.1} parent=43 // pred_check_branch
          %595 = sbr.rel (%p593) target = $region60
        $region59: #{roberta_linear_classifier.1} parent=43 // pred_region
          %p596 = scmp.lt.s32.totalorder %s29, 1
          %s597 = scalar_select %p596, %s29, 1
          %s598 = scalar_lea.vmem %s8, %s597
        $region60: #{roberta_linear_classifier.1} parent=43 // pred_fallthru
          _
        // Predicated region
        $region61: #{roberta_linear_classifier.1} parent=43 // pred_check
          %p599 = pneg %p258
        $region62: #{roberta_linear_classifier.1} parent=43 // pred_check_branch
          %601 = sbr.rel (%p599) target = $region64
        $region63: #{roberta_linear_classifier.1} parent=43 // pred_region
          %p602 = scmp.lt.s32.totalorder %s29, 1
          %s603 = scalar_select %p602, %s29, 1
          %s604 = scalar_lea.vmem %s9, %s603
        $region64: #{roberta_linear_classifier.1} parent=43 // pred_fallthru
          _
        // Predicated region
        $region65: #{roberta_linear_classifier.1} parent=43 // pred_check
          %p605 = pneg %p284
        $region66: #{roberta_linear_classifier.1} parent=43 // pred_check_branch
          %607 = sbr.rel (%p605) target = $region68
        $region67: #{roberta_linear_classifier.1} parent=43 // pred_region
          %p608 = scmp.lt.s32.totalorder %s29, 1
          %s609 = scalar_select %p608, %s29, 1
          %s610 = scalar_lea.vmem %s10, %s609
        $region68: #{roberta_linear_classifier.1} parent=43 // pred_fallthru
          _
        // Predicated region
        $region69: #{roberta_linear_classifier.1} parent=43 // pred_check
          %p611 = pneg %p310
        $region70: #{roberta_linear_classifier.1} parent=43 // pred_check_branch
          %613 = sbr.rel (%p611) target = $region72
        $region71: #{roberta_linear_classifier.1} parent=43 // pred_region
          %p614 = scmp.lt.s32.totalorder %s29, 1
          %s615 = scalar_select %p614, %s29, 1
          %s616 = smul.addr %s615, 32
          %s617 = smul.addr %s616, 4
          %s618 = scalar_lea.vmem %s11, %s617
        $region72: #{roberta_linear_classifier.1} parent=43 // pred_fallthru
          _
        // Predicated region
        $region73: #{roberta_linear_classifier.1} parent=43 // pred_check
          %p619 = pneg %p336
        $region74: #{roberta_linear_classifier.1} parent=43 // pred_check_branch
          %621 = sbr.rel (%p619) target = $region76
        $region75: #{roberta_linear_classifier.1} parent=43 // pred_region
          %p622 = scmp.lt.s32.totalorder %s29, 1
          %s623 = scalar_select %p622, %s29, 1
          %s624 = smul.addr %s623, 2
          %s625 = scalar_lea.vmem %s12, %s624
        $region76: #{roberta_linear_classifier.1} parent=43 // pred_fallthru
          _
        // Predicated region
        $region77: #{roberta_linear_classifier.1} parent=43 // pred_check
          %p626 = pneg %p362
        $region78: #{roberta_linear_classifier.1} parent=43 // pred_check_branch
          %628 = sbr.rel (%p626) target = $region80
        $region79: #{roberta_linear_classifier.1} parent=43 // pred_region
          %p629 = scmp.lt.s32.totalorder %s29, 1
          %s630 = scalar_select %p629, %s29, 1
          %s631 = smul.addr %s630, 32
          %s632 = smul.addr %s631, 4
          %s633 = scalar_lea.vmem %s13, %s632
        $region80: #{roberta_linear_classifier.1} parent=43 // pred_fallthru
          _
        // Predicated region
        $region81: #{roberta_linear_classifier.1} parent=43 // pred_check
          %p634 = pneg %p388
        $region82: #{roberta_linear_classifier.1} parent=43 // pred_check_branch
          %636 = sbr.rel (%p634) target = $region84
        $region83: #{roberta_linear_classifier.1} parent=43 // pred_region
          %p637 = scmp.lt.s32.totalorder %s29, 1
          %s638 = scalar_select %p637, %s29, 1
          %s639 = scalar_lea.vmem %s14, %s638
        $region84: #{roberta_linear_classifier.1} parent=43 // pred_fallthru
          _
        // Predicated region
        $region85: #{roberta_linear_classifier.1} parent=43 // pred_check
          %p640 = pneg %p414
        $region86: #{roberta_linear_classifier.1} parent=43 // pred_check_branch
          %642 = sbr.rel (%p640) target = $region88
        $region87: #{roberta_linear_classifier.1} parent=43 // pred_region
          %p643 = scmp.lt.s32.totalorder %s29, 1
          %s644 = scalar_select %p643, %s29, 1
          %s645 = scalar_lea.vmem %s15, %s644
        $region88: #{roberta_linear_classifier.1} parent=43 // pred_fallthru
          _
        // Predicated region
        $region89: #{roberta_linear_classifier.1} parent=43 // pred_check
          %p646 = pneg %p440
        $region90: #{roberta_linear_classifier.1} parent=43 // pred_check_branch
          %648 = sbr.rel (%p646) target = $region92
        $region91: #{roberta_linear_classifier.1} parent=43 // pred_region
          %p649 = scmp.lt.s32.totalorder %s29, 1
          %s650 = scalar_select %p649, %s29, 1
          %s651 = scalar_lea.vmem %s16, %s650
        $region92: #{roberta_linear_classifier.1} parent=43 // pred_fallthru
          _
      $region44: #{roberta_linear_classifier.1} parent=5 // pred_fallthru
        _
      %p652 = scmp.le.s32.totalorder 1, %s29
      %p653 = scmp.lt.s32.totalorder %s29, 3
      %p654 = pnand %p652, %p653
      %p655 = pneg %p654
      // Predicated region
      $region93: #{roberta_linear_classifier.1} parent=5 // pred_check
        _
      $region94: #{roberta_linear_classifier.1} parent=5 // pred_check_branch
        %657 = sbr.rel (%p654) target = $region96
      $region95: #{roberta_linear_classifier.1} parent=5 // pred_region
        %s658 = ssub.s32 %s29, 1
        %p659 = pneg %p50
        %p660 = pneg %p47
        %p661 = pneg %p71
        %p662 = pneg %p68
        %p663 = pneg %p92
        %p664 = pneg %p89
        %p665 = pneg %p113
        %p666 = pneg %p110
        %p667 = pneg %p134
        %p668 = pneg %p131
        %p669 = scmp.lt.s32.totalorder %s34, 1
        %s670 = scalar_select %p669, %s34, 1
        %s671 = smul.addr %s670, 48
        %s672 = smul.addr %s671, 4
        %s673 = scalar_lea.vmem %s5, %s672
        %p674 = pneg %p160
        %p675 = pneg %p157
        %p676 = scmp.lt.s32.totalorder %s34, 1
        %s677 = scalar_select %p676, %s34, 1
        %s678 = smul.addr %s677, 3
        %s679 = scalar_lea.vmem %s6, %s678
        %p680 = pneg %p186
        %p681 = pneg %p183
        %p682 = scmp.lt.s32.totalorder %s34, 1
        %s683 = scalar_select %p682, %s34, 1
        %s684 = smul.addr %s683, 16
        %s685 = smul.addr %s684, 4
        %s686 = scalar_lea.vmem %s7, %s685
        %p687 = pneg %p212
        %p688 = pneg %p209
        %p689 = scmp.lt.s32.totalorder %s34, 1
        %s690 = scalar_select %p689, %s34, 1
        %s691 = scalar_lea.vmem %s8, %s690
        %p692 = pneg %p238
        %p693 = pneg %p235
        %p694 = scmp.lt.s32.totalorder %s34, 1
        %s695 = scalar_select %p694, %s34, 1
        %s696 = scalar_lea.vmem %s9, %s695
        %p697 = pneg %p264
        %p698 = pneg %p261
        %p699 = scmp.lt.s32.totalorder %s34, 1
        %s700 = scalar_select %p699, %s34, 1
        %s701 = scalar_lea.vmem %s10, %s700
        %p702 = pneg %p290
        %p703 = pneg %p287
        %p704 = scmp.lt.s32.totalorder %s34, 1
        %s705 = scalar_select %p704, %s34, 1
        %s706 = smul.addr %s705, 32
        %s707 = smul.addr %s706, 4
        %s708 = scalar_lea.vmem %s11, %s707
        %p709 = pneg %p316
        %p710 = pneg %p313
        %p711 = scmp.lt.s32.totalorder %s34, 1
        %s712 = scalar_select %p711, %s34, 1
        %s713 = smul.addr %s712, 2
        %s714 = scalar_lea.vmem %s12, %s713
        %p715 = pneg %p342
        %p716 = pneg %p339
        %p717 = scmp.lt.s32.totalorder %s34, 1
        %s718 = scalar_select %p717, %s34, 1
        %s719 = smul.addr %s718, 32
        %s720 = smul.addr %s719, 4
        %s721 = scalar_lea.vmem %s13, %s720
        %p722 = pneg %p368
        %p723 = pneg %p365
        %p724 = scmp.lt.s32.totalorder %s34, 1
        %s725 = scalar_select %p724, %s34, 1
        %s726 = scalar_lea.vmem %s14, %s725
        %p727 = pneg %p394
        %p728 = pneg %p391
        %p729 = scmp.lt.s32.totalorder %s34, 1
        %s730 = scalar_select %p729, %s34, 1
        %s731 = scalar_lea.vmem %s15, %s730
        %p732 = pneg %p420
        %p733 = pneg %p417
        %p734 = scmp.lt.s32.totalorder %s34, 1
        %s735 = scalar_select %p734, %s34, 1
        %s736 = scalar_lea.vmem %s16, %s735
        %p737 = pneg %p446
        %p738 = pneg %p443
        %p739 = pneg %p467
        %p740 = pneg %p464
        %p741 = pneg %p488
        %p742 = pneg %p485
        %p743 = pneg %p509
        %p744 = pneg %p506
        %p745 = pneg %p530
        %p746 = pneg %p527
        %p747 = scmp.lt.s32.totalorder %s34, 1
        %s748 = scalar_select %p747, %s34, 1
        %s749 = smul.addr %s748, 48
        %s750 = smul.addr %s749, 4
        %s751 = scalar_lea.vmem %s5, %s750
        %p752 = scmp.lt.s32.totalorder %s34, 1
        %s753 = scalar_select %p752, %s34, 1
        %s754 = smul.addr %s753, 3
        %s755 = scalar_lea.vmem %s6, %s754
        %p756 = scmp.lt.s32.totalorder %s34, 1
        %s757 = scalar_select %p756, %s34, 1
        %s758 = smul.addr %s757, 16
        %s759 = smul.addr %s758, 4
        %s760 = scalar_lea.vmem %s7, %s759
        %p761 = scmp.lt.s32.totalorder %s34, 1
        %s762 = scalar_select %p761, %s34, 1
        %s763 = scalar_lea.vmem %s8, %s762
        %p764 = scmp.lt.s32.totalorder %s34, 1
        %s765 = scalar_select %p764, %s34, 1
        %s766 = scalar_lea.vmem %s9, %s765
        %p767 = scmp.lt.s32.totalorder %s34, 1
        %s768 = scalar_select %p767, %s34, 1
        %s769 = scalar_lea.vmem %s10, %s768
        %p770 = scmp.lt.s32.totalorder %s34, 1
        %s771 = scalar_select %p770, %s34, 1
        %s772 = smul.addr %s771, 32
        %s773 = smul.addr %s772, 4
        %s774 = scalar_lea.vmem %s11, %s773
        %p775 = scmp.lt.s32.totalorder %s34, 1
        %s776 = scalar_select %p775, %s34, 1
        %s777 = smul.addr %s776, 2
        %s778 = scalar_lea.vmem %s12, %s777
        %p779 = scmp.lt.s32.totalorder %s34, 1
        %s780 = scalar_select %p779, %s34, 1
        %s781 = smul.addr %s780, 32
        %s782 = smul.addr %s781, 4
        %s783 = scalar_lea.vmem %s13, %s782
        %p784 = scmp.lt.s32.totalorder %s34, 1
        %s785 = scalar_select %p784, %s34, 1
        %s786 = scalar_lea.vmem %s14, %s785
        %p787 = scmp.lt.s32.totalorder %s34, 1
        %s788 = scalar_select %p787, %s34, 1
        %s789 = scalar_lea.vmem %s15, %s788
        %p790 = scmp.lt.s32.totalorder %s34, 1
        %s791 = scalar_select %p790, %s34, 1
        %s792 = scalar_lea.vmem %s16, %s791
        %p794 = scmp.eq.s32.totalorder %s34, 0
        // Predicated region
        $region97: #{roberta_linear_classifier.1} parent=95 // pred_check
          %p795 = pneg %p794
        $region98: #{roberta_linear_classifier.1} parent=95 // pred_check_branch
          %797 = sbr.rel (%p795) target = $region100
        $region99: #{roberta_linear_classifier.1} parent=95 // pred_region
          %v798 = vld [vmem:[%s0] sm:$0xff]
          %v799 = vld [vmem:[%s0 + $0x8] sm:$0xff]
          %v800 = vld [vmem:[%s1] sm:$0x1]
          %v801 = vld [vmem:[%s2] sm:$0x1]
          %802 = vadd.xlane.f32.xlu0 %v798
          %v803 = vpop.xlane.xlu0 %802
          %804 = vadd.xlane.f32.xlu0 %v799
          %v805 = vpop.xlane.xlu0 %804
          %v806 = vrcp.pop 128.0
          %v807 = vmul.f32 %v803, %v806
          %v808 = vmul.f32 %v805, %v806
          %v809 = vsub.f32 %v798, %v807
          %v810 = vsub.f32 %v799, %v808
          %v811 = vmul.f32 %v809, %v809
          %v812 = vmul.f32 %v810, %v810
          %813 = vadd.xlane.f32.xlu0 %v811
          %v814 = vpop.xlane.xlu0 %813
          %815 = vadd.xlane.f32.xlu0 %v812
          %v816 = vpop.xlane.xlu0 %815
          %v817 = vmul.f32 %v814, %v806
          %v818 = vmul.f32 %v816, %v806
          %v819 = vadd.f32 %v817, 1e-05
          %v820 = vadd.f32 %v818, 1e-05
          %v821 = vrsqrt.pop %v819
          %v822 = vrsqrt.pop %v820
          %v823 = vmul.f32 %v809, %v821
          %v824 = vmul.f32 %v810, %v822
          %v826 = vlaneseq
          %v827 = vshrl.u32 %v826, 7
          %v828 = vsub.s32 0, %v827
          %v829 = vrot.slane %v800, %v828
          %v831 = vmul.f32 %v823, %v829
          %v832 = vmul.f32 %v824, %v829
          %v834 = vlaneseq
          %v835 = vshrl.u32 %v834, 7
          %v836 = vsub.s32 0, %v835
          %v837 = vrot.slane %v801, %v836
          %v839 = vadd.f32 %v831, %v837
          %v840 = vadd.f32 %v832, %v837
          %841 = vst [vmem:[#allocation2] sm:$0xff] %v839
          %842 = vst [vmem:[#allocation2 + $0x8] sm:$0xff] %v840
        $region100: #{roberta_linear_classifier.1} parent=95 // pred_fallthru
          _
        %v843 = vld [vmem:[#allocation2] sm:$0xff]
        %v844 = vld [vmem:[#allocation2 + $0x8] sm:$0xff]
        %v845 = vpack.c.bf16 %v844, %v843
        %v846 = vld [vmem:[%s751] sm:$0xff]
        %v847 = vld [vmem:[%s751 + $0x8] sm:$0xf]
        %v848 = vld [vmem:[%s751 + $0xc] sm:$0xff]
        %v849 = vld [vmem:[%s751 + $0x14] sm:$0xf]
        %v850 = vld [vmem:[%s751 + $0x18] sm:$0xff]
        %v851 = vld [vmem:[%s751 + $0x20] sm:$0xf]
        %v852 = vld [vmem:[%s751 + $0x24] sm:$0xff]
        %v853 = vld [vmem:[%s751 + $0x2c] sm:$0xf]
        %v854 = vld [vmem:[%s751 + $0x30] sm:$0xff]
        %v855 = vld [vmem:[%s751 + $0x38] sm:$0xf]
        %v856 = vld [vmem:[%s751 + $0x3c] sm:$0xff]
        %v857 = vld [vmem:[%s751 + $0x44] sm:$0xf]
        %v858 = vld [vmem:[%s751 + $0x48] sm:$0xff]
        %v859 = vld [vmem:[%s751 + $0x50] sm:$0xf]
        %v860 = vld [vmem:[%s751 + $0x54] sm:$0xff]
        %v861 = vld [vmem:[%s751 + $0x5c] sm:$0xf]
        %v862 = vld [vmem:[%s751 + $0x60] sm:$0xff]
        %v863 = vld [vmem:[%s751 + $0x68] sm:$0xf]
        %v864 = vld [vmem:[%s751 + $0x6c] sm:$0xff]
        %v865 = vld [vmem:[%s751 + $0x74] sm:$0xf]
        %v866 = vld [vmem:[%s751 + $0x78] sm:$0xff]
        %v867 = vld [vmem:[%s751 + $0x80] sm:$0xf]
        %v868 = vld [vmem:[%s751 + $0x84] sm:$0xff]
        %v869 = vld [vmem:[%s751 + $0x8c] sm:$0xf]
        %v870 = vld [vmem:[%s751 + $0x90] sm:$0xff]
        %v871 = vld [vmem:[%s751 + $0x98] sm:$0xf]
        %v872 = vld [vmem:[%s751 + $0x9c] sm:$0xff]
        %v873 = vld [vmem:[%s751 + $0xa4] sm:$0xf]
        %v874 = vld [vmem:[%s751 + $0xa8] sm:$0xff]
        %v875 = vld [vmem:[%s751 + $0xb0] sm:$0xf]
        %v876 = vld [vmem:[%s751 + $0xb4] sm:$0xff]
        %v877 = vld [vmem:[%s751 + $0xbc] sm:$0xf]
        %v878 = vld [vmem:[%s755] sm:$0x7]
        %v880 = vlaneseq
        %v881 = vshrl.u32 %v880, 7
        %v882 = vsub.s32 0, %v881
        %v883 = vrot.slane %v878, %v882
        %v884 = vlaneseq
        %v885 = vshrl.u32 %v884, 7
        %v886 = vsub.s32 1, %v885
        %v887 = vrot.slane %v878, %v886
        %v888 = vlaneseq
        %v889 = vshrl.u32 %v888, 7
        %v890 = vsub.s32 2, %v889
        %v891 = vrot.slane %v878, %v890
        %v927 = vunpack.c.l.b16 %v846
        %v928 = vunpack.c.h.b16 %v846
        %v929 = vunpack.c.l.b16 %v847
        %v930 = vunpack.c.l.b16 %v848
        %v931 = vunpack.c.h.b16 %v848
        %v932 = vunpack.c.l.b16 %v849
        %v933 = vunpack.c.l.b16 %v850
        %v934 = vunpack.c.h.b16 %v850
        %v935 = vunpack.c.l.b16 %v851
        %v936 = vunpack.c.l.b16 %v852
        %v937 = vunpack.c.h.b16 %v852
        %v938 = vunpack.c.l.b16 %v853
        %v939 = vunpack.c.l.b16 %v854
        %v940 = vunpack.c.h.b16 %v854
        %v941 = vunpack.c.l.b16 %v855
        %v942 = vunpack.c.l.b16 %v856
        %v943 = vunpack.c.h.b16 %v856
        %v944 = vunpack.c.l.b16 %v857
        %v945 = vunpack.c.l.b16 %v858
        %v946 = vunpack.c.h.b16 %v858
        %v947 = vunpack.c.l.b16 %v859
        %v948 = vunpack.c.l.b16 %v860
        %v949 = vunpack.c.h.b16 %v860
        %v950 = vunpack.c.l.b16 %v861
        %v951 = vunpack.c.l.b16 %v862
        %v952 = vunpack.c.h.b16 %v862
        %v953 = vunpack.c.l.b16 %v863
        %v954 = vunpack.c.l.b16 %v864
        %v955 = vunpack.c.h.b16 %v864
        %v956 = vunpack.c.l.b16 %v865
        %v957 = vunpack.c.l.b16 %v866
        %v958 = vunpack.c.h.b16 %v866
        %v959 = vunpack.c.l.b16 %v867
        %v960 = vunpack.c.l.b16 %v868
        %v961 = vunpack.c.h.b16 %v868
        %v962 = vunpack.c.l.b16 %v869
        %v963 = vunpack.c.l.b16 %v870
        %v964 = vunpack.c.h.b16 %v870
        %v965 = vunpack.c.l.b16 %v871
        %v966 = vunpack.c.l.b16 %v872
        %v967 = vunpack.c.h.b16 %v872
        %v968 = vunpack.c.l.b16 %v873
        %v969 = vunpack.c.l.b16 %v874
        %v970 = vunpack.c.h.b16 %v874
        %v971 = vunpack.c.l.b16 %v875
        %v972 = vunpack.c.l.b16 %v876
        %v973 = vunpack.c.h.b16 %v876
        %v974 = vunpack.c.l.b16 %v877
        %v975 = vpack.c.b16 %v930, %v927
        %v976 = vpack.c.b16 %v931, %v928
        %v977 = vpack.c.b16 %v932, %v929
        %v978 = vpack.c.b16 %v936, %v933
        %v979 = vpack.c.b16 %v937, %v934
        %v980 = vpack.c.b16 %v938, %v935
        %v981 = vpack.c.b16 %v942, %v939
        %v982 = vpack.c.b16 %v943, %v940
        %v983 = vpack.c.b16 %v944, %v941
        %v984 = vpack.c.b16 %v948, %v945
        %v985 = vpack.c.b16 %v949, %v946
        %v986 = vpack.c.b16 %v950, %v947
        %v987 = vpack.c.b16 %v954, %v951
        %v988 = vpack.c.b16 %v955, %v952
        %v989 = vpack.c.b16 %v956, %v953
        %v990 = vpack.c.b16 %v960, %v957
        %v991 = vpack.c.b16 %v961, %v958
        %v992 = vpack.c.b16 %v962, %v959
        %v993 = vpack.c.b16 %v966, %v963
        %v994 = vpack.c.b16 %v967, %v964
        %v995 = vpack.c.b16 %v968, %v965
        %v996 = vpack.c.b16 %v972, %v969
        %v997 = vpack.c.b16 %v973, %v970
        %v998 = vpack.c.b16 %v974, %v971
        %1023 = vmatprep.subr.bf16.mxu0 %v976
        %1024 = vmatpush1.bf16.msra.mxu0 %v975
        %1025 = vmatprep.subr.bf16.mxu0 %v979
        %1026 = vmatpush1.bf16.msra.mxu0 %v978
        %1027 = vmatprep.subr.bf16.mxu0 %v982
        %1028 = vmatpush1.bf16.msra.mxu0 %v981
        %1029 = vmatprep.subr.bf16.mxu0 %v985
        %1030 = vmatpush1.bf16.msra.mxu0 %v984
        %1031 = vmatprep.subr.bf16.mxu0 %v988
        %1032 = vmatpush1.bf16.msra.mxu0 %v987
        %1033 = vmatprep.subr.bf16.mxu0 %v991
        %1034 = vmatpush1.bf16.msra.mxu0 %v990
        %1035 = vmatprep.subr.bf16.mxu0 %v994
        %1036 = vmatpush1.bf16.msra.mxu0 %v993
        %1037 = vmatprep.subr.bf16.mxu0 %v997
        %1038 = vmatpush1.bf16.msra.mxu0 %v996
        %1039 = vmatprep.subr.bf16.mxu0 0
        %1040 = vmatpush1.bf16.msra.mxu0 0
        %1041 = vmatprep.subr.bf16.mxu0 0
        %1042 = vmatpush1.bf16.msra.mxu0 0
        %1043 = vmatprep.subr.bf16.mxu0 0
        %1044 = vmatpush1.bf16.msra.mxu0 0
        %1045 = vmatprep.subr.bf16.mxu0 0
        %1046 = vmatpush1.bf16.msra.mxu0 0
        %1047 = vmatprep.subr.bf16.mxu0 0
        %1048 = vmatpush1.bf16.msra.mxu0 0
        %1049 = vmatprep.subr.bf16.mxu0 0
        %1050 = vmatpush1.bf16.msra.mxu0 0
        %1051 = vmatprep.subr.bf16.mxu0 0
        %1052 = vmatpush1.bf16.msra.mxu0 0
        %1053 = vmatprep.subr.bf16.mxu0 0
        %1054 = vmatpush1.bf16.msra.mxu0 0
        %1055 = vmatprep.mubr.bf16.mxu0 0
        %1056 = vmatmul.mubr.bf16.gmra.mrb[0].mxu0 %v845
        %v1057 = vpop.f32.mrb[0].mxu0
        %v1058 = vadd.f32 %v883, %v1057
        %v1059 = vpop.f32.mrb[0].mxu0
        %v1060 = vadd.f32 %v887, %v1059
        %v1061 = vpop.f32.mrb[0].mxu0
        %v1062 = vadd.f32 %v883, %v1061
        %v1063 = vpop.f32.mrb[0].mxu0
        %v1064 = vadd.f32 %v887, %v1063
        %1065 = vdwg.mxu0
        %1066 = vmatprep.subr.bf16.mxu0 0
        %1067 = vmatpush1.bf16.msra.mxu0 %v977
        %1068 = vmatprep.subr.bf16.mxu0 0
        %1069 = vmatpush1.bf16.msra.mxu0 %v980
        %1070 = vmatprep.subr.bf16.mxu0 0
        %1071 = vmatpush1.bf16.msra.mxu0 %v983
        %1072 = vmatprep.subr.bf16.mxu0 0
        %1073 = vmatpush1.bf16.msra.mxu0 %v986
        %1074 = vmatprep.subr.bf16.mxu0 0
        %1075 = vmatpush1.bf16.msra.mxu0 %v989
        %1076 = vmatprep.subr.bf16.mxu0 0
        %1077 = vmatpush1.bf16.msra.mxu0 %v992
        %1078 = vmatprep.subr.bf16.mxu0 0
        %1079 = vmatpush1.bf16.msra.mxu0 %v995
        %1080 = vmatprep.subr.bf16.mxu0 0
        %1081 = vmatpush1.bf16.msra.mxu0 %v998
        %1082 = vmatprep.subr.bf16.mxu0 0
        %1083 = vmatpush1.bf16.msra.mxu0 0
        %1084 = vmatprep.subr.bf16.mxu0 0
        %1085 = vmatpush1.bf16.msra.mxu0 0
        %1086 = vmatprep.subr.bf16.mxu0 0
        %1087 = vmatpush1.bf16.msra.mxu0 0
        %1088 = vmatprep.subr.bf16.mxu0 0
        %1089 = vmatpush1.bf16.msra.mxu0 0
        %1090 = vmatprep.subr.bf16.mxu0 0
        %1091 = vmatpush1.bf16.msra.mxu0 0
        %1092 = vmatprep.subr.bf16.mxu0 0
        %1093 = vmatpush1.bf16.msra.mxu0 0
        %1094 = vmatprep.subr.bf16.mxu0 0
        %1095 = vmatpush1.bf16.msra.mxu0 0
        %1096 = vmatprep.subr.bf16.mxu0 0
        %1097 = vmatpush1.bf16.msra.mxu0 0
        %1098 = vmatprep.mubr.bf16.mxu0 0
        %1099 = vmatmul.mubr.bf16.gmra.mrb[0].mxu0 %v845
        %v1100 = vpop.f32.mrb[0].mxu0
        %v1101 = vadd.f32 %v891, %v1100
        %v1102 = vpop.f32.mrb[0].mxu0
        %v1103 = vpop.f32.mrb[0].mxu0
        %v1104 = vadd.f32 %v891, %v1103
        %v1105 = vpop.f32.mrb[0].mxu0
        %1106 = vdwg.mxu0
        %v1107 = vpack.c.bf16 %v1062, %v1058
        %v1108 = vld [vmem:[%s4] sm:$0xf]
        %v1109 = vld [vmem:[%s4 + $0x4] sm:$0xf]
        %v1110 = vld [vmem:[%s4 + $0x8] sm:$0xf]
        %v1111 = vld [vmem:[%s4 + $0xc] sm:$0xf]
        %v1112 = vld [vmem:[%s4 + $0x10] sm:$0xf]
        %v1113 = vld [vmem:[%s4 + $0x14] sm:$0xf]
        %v1114 = vld [vmem:[%s4 + $0x18] sm:$0xf]
        %v1115 = vld [vmem:[%s4 + $0x1c] sm:$0xf]
        %v1116 = vpack.c.bf16 %v1060, %v1060
        %v1117 = vpack.c.bf16 %v1101, %v1101
        %v1118 = vpack.c.bf16 %v1064, %v1064
        %v1119 = vpack.c.bf16 %v1104, %v1104
        %v1121 = vrot.slane %v1116, 4
        %v1123 = vrot.slane %v1118, 4
        %vm1124 = vcmask 1043456
        %v1127 = vsel %vm1124, %v1116, %v1121
        %v1131 = vsel %vm1124, %v1118, %v1123
        %v1141 = vunpack.c.l.b16 %v1108
        %v1142 = vunpack.c.l.b16 %v1109
        %v1143 = vunpack.c.l.b16 %v1110
        %v1144 = vunpack.c.l.b16 %v1111
        %v1145 = vunpack.c.l.b16 %v1112
        %v1146 = vunpack.c.l.b16 %v1113
        %v1147 = vunpack.c.l.b16 %v1114
        %v1148 = vunpack.c.l.b16 %v1115
        %v1149 = vpack.c.b16 %v1142, %v1141
        %v1150 = vpack.c.b16 %v1144, %v1143
        %v1151 = vpack.c.b16 %v1146, %v1145
        %v1152 = vpack.c.b16 %v1148, %v1147
        %v1157 = vmul.bf16 %v1127, %v1149
        %v1158 = vmul.bf16 %v1127, %v1150
        %v1159 = vmul.bf16 %v1131, %v1151
        %v1160 = vmul.bf16 %v1131, %v1152
        %v1162 = vrot.slane %v1117, 4
        %v1164 = vrot.slane %v1119, 4
        %v1167 = vsel %vm1124, %v1117, %v1162
        %v1171 = vsel %vm1124, %v1119, %v1164
        %v1173 = vmul.bf16 %v1167, %v1149
        %v1174 = vmul.bf16 %v1167, %v1150
        %v1175 = vmul.bf16 %v1171, %v1151
        %v1176 = vmul.bf16 %v1171, %v1152
        %1177 = vmatprep.subr.bf16.mxu0 0
        %1178 = vmatpush1.bf16.xpose.msra.mxu0 %v1157
        %1179 = vmatprep.subr.bf16.mxu0 0
        %1180 = vmatpush1.bf16.xpose.msra.mxu0 %v1158
        %1181 = vmatprep.subr.bf16.mxu0 0
        %1182 = vmatpush1.bf16.xpose.msra.mxu0 %v1159
        %1183 = vmatprep.subr.bf16.mxu0 0
        %1184 = vmatpush1.bf16.xpose.msra.mxu0 %v1160
        %1185 = vmatprep.subr.bf16.mxu0 0
        %1186 = vmatpush1.bf16.xpose.msra.mxu0 0
        %1187 = vmatprep.subr.bf16.mxu0 0
        %1188 = vmatpush1.bf16.xpose.msra.mxu0 0
        %1189 = vmatprep.subr.bf16.mxu0 0
        %1190 = vmatpush1.bf16.xpose.msra.mxu0 0
        %1191 = vmatprep.subr.bf16.mxu0 0
        %1192 = vmatpush1.bf16.xpose.msra.mxu0 0
        %1193 = vmatprep.subr.bf16.mxu0 0
        %1194 = vmatpush1.bf16.xpose.msra.mxu0 0
        %1195 = vmatprep.subr.bf16.mxu0 0
        %1196 = vmatpush1.bf16.xpose.msra.mxu0 0
        %1197 = vmatprep.subr.bf16.mxu0 0
        %1198 = vmatpush1.bf16.xpose.msra.mxu0 0
        %1199 = vmatprep.subr.bf16.mxu0 0
        %1200 = vmatpush1.bf16.xpose.msra.mxu0 0
        %1201 = vmatprep.subr.bf16.mxu0 0
        %1202 = vmatpush1.bf16.xpose.msra.mxu0 0
        %1203 = vmatprep.subr.bf16.mxu0 0
        %1204 = vmatpush1.bf16.xpose.msra.mxu0 0
        %1205 = vmatprep.subr.bf16.mxu0 0
        %1206 = vmatpush1.bf16.xpose.msra.mxu0 0
        %1207 = vmatprep.subr.bf16.mxu0 0
        %1208 = vmatpush1.bf16.xpose.msra.mxu0 0
        %1209 = vmatprep.mubr.bf16.mxu0 0
        %1210 = vmatmul.mubr.bf16.gmra.mrb[0].mxu0 %v1107
        %v1211 = vpop.f32.mrb[0].mxu0
        %v1212 = vadd.f32 0.0, %v1211
        %v1213 = vpop.f32.mrb[0].mxu0
        %v1214 = vpop.f32.mrb[0].mxu0
        %v1215 = vadd.f32 0.0, %v1214
        %v1216 = vpop.f32.mrb[0].mxu0
        %1217 = vdwg.mxu0
        %v1218 = vmul.f32 %v1212, 0.17677669
        %v1219 = vmul.f32 %v1215, 0.17677669
        %v1220 = vld [vmem:[%s3] sm:$0xff]
        %v1221 = vld [vmem:[%s3 + $0x8] sm:$0xff]
        %v1222 = vadd.f32 %v1218, %v1220
        %v1223 = vadd.f32 %v1219, %v1221
        %vm1224 = vcmask 523264
        %v1225 = vsel %vm1224, %v1222, -inf
        %1226 = vmax.xlane.f32.xlu0 %v1225
        %v1227 = vpop.xlane.xlu0 %1226
        %v1228 = vsel %vm1224, %v1223, -inf
        %1229 = vmax.xlane.f32.xlu0 %v1228
        %v1230 = vpop.xlane.xlu0 %1229
        %v1231 = vsub.f32 %v1222, %v1227
        %v1232 = vsub.f32 %v1223, %v1230
        %v1233 = vmul.f32 %v1231, 1.442695
        %v1234 = vpow.pop %v1233
        %v1235 = vmul.f32 %v1232, 1.442695
        %v1236 = vpow.pop %v1235
        %v1237 = vpack.c.bf16 %v1236, %v1234
        %v1239 = vsel %vm1224, %v1237, 0
        %1241 = vmatprep.subr.bf16.mxu0 %v1149
        %1242 = vmatpush1.bf16.msra.mxu0 %v1173
        %1243 = vmatprep.subr.bf16.mxu0 %v1150
        %1244 = vmatpush1.bf16.msra.mxu0 %v1174
        %1245 = vmatprep.subr.bf16.mxu0 %v1151
        %1246 = vmatpush1.bf16.msra.mxu0 %v1175
        %1247 = vmatprep.subr.bf16.mxu0 %v1152
        %1248 = vmatpush1.bf16.msra.mxu0 %v1176
        %1249 = vmatprep.subr.bf16.mxu0 0
        %1250 = vmatpush1.bf16.msra.mxu0 0
        %1251 = vmatprep.subr.bf16.mxu0 0
        %1252 = vmatpush1.bf16.msra.mxu0 0
        %1253 = vmatprep.subr.bf16.mxu0 0
        %1254 = vmatpush1.bf16.msra.mxu0 0
        %1255 = vmatprep.subr.bf16.mxu0 0
        %1256 = vmatpush1.bf16.msra.mxu0 0
        %1257 = vmatprep.subr.bf16.mxu0 0
        %1258 = vmatpush1.bf16.msra.mxu0 0
        %1259 = vmatprep.subr.bf16.mxu0 0
        %1260 = vmatpush1.bf16.msra.mxu0 0
        %1261 = vmatprep.subr.bf16.mxu0 0
        %1262 = vmatpush1.bf16.msra.mxu0 0
        %1263 = vmatprep.subr.bf16.mxu0 0
        %1264 = vmatpush1.bf16.msra.mxu0 0
        %1265 = vmatprep.subr.bf16.mxu0 0
        %1266 = vmatpush1.bf16.msra.mxu0 0
        %1267 = vmatprep.subr.bf16.mxu0 0
        %1268 = vmatpush1.bf16.msra.mxu0 0
        %1269 = vmatprep.subr.bf16.mxu0 0
        %1270 = vmatpush1.bf16.msra.mxu0 0
        %1271 = vmatprep.subr.bf16.mxu0 0
        %1272 = vmatpush1.bf16.msra.mxu0 0
        %1273 = vmatprep.mubr.bf16.mxu0 0
        %1274 = vmatmul.mubr.bf16.gmra.mrb[0].mxu0 %v1239
        %v1275 = vpop.f32.mrb[0].mxu0
        %v1276 = vadd.f32 0.0, %v1275
        %v1277 = vpop.f32.mrb[0].mxu0
        %v1278 = vadd.f32 0.0, %v1277
        %v1279 = vpop.f32.mrb[0].mxu0
        %v1280 = vadd.f32 0.0, %v1279
        %v1281 = vpop.f32.mrb[0].mxu0
        %v1282 = vadd.f32 0.0, %v1281
        %1283 = vdwg.mxu0
        %v1284 = vmax.f32 %v1278, 1e-30
        %v1285 = vmax.f32 %v1282, 1e-30
        %v1286 = vrcp.pop %v1284
        %v1287 = vrcp.pop %v1285
        %v1288 = vmul.f32 %v1276, %v1286
        %v1289 = vmul.f32 %v1280, %v1287
        %v1290 = vpack.c.bf16 %v1289, %v1288
        %v1291 = vld [vmem:[%s760] sm:$0xf]
        %v1292 = vld [vmem:[%s760 + $0x4] sm:$0xf]
        %v1293 = vld [vmem:[%s760 + $0x8] sm:$0xf]
        %v1294 = vld [vmem:[%s760 + $0xc] sm:$0xf]
        %v1295 = vld [vmem:[%s760 + $0x10] sm:$0xf]
        %v1296 = vld [vmem:[%s760 + $0x14] sm:$0xf]
        %v1297 = vld [vmem:[%s760 + $0x18] sm:$0xf]
        %v1298 = vld [vmem:[%s760 + $0x1c] sm:$0xf]
        %v1299 = vld [vmem:[%s760 + $0x20] sm:$0xf]
        %v1300 = vld [vmem:[%s760 + $0x24] sm:$0xf]
        %v1301 = vld [vmem:[%s760 + $0x28] sm:$0xf]
        %v1302 = vld [vmem:[%s760 + $0x2c] sm:$0xf]
        %v1303 = vld [vmem:[%s760 + $0x30] sm:$0xf]
        %v1304 = vld [vmem:[%s760 + $0x34] sm:$0xf]
        %v1305 = vld [vmem:[%s760 + $0x38] sm:$0xf]
        %v1306 = vld [vmem:[%s760 + $0x3c] sm:$0xf]
        %v1307 = vld [vmem:[%s763] sm:$0x1]
        %v1309 = vlaneseq
        %v1310 = vshrl.u32 %v1309, 7
        %v1311 = vsub.s32 0, %v1310
        %v1312 = vrot.slane %v1307, %v1311
        %v1330 = vunpack.c.l.b16 %v1291
        %v1331 = vunpack.c.l.b16 %v1292
        %v1332 = vunpack.c.l.b16 %v1293
        %v1333 = vunpack.c.l.b16 %v1294
        %v1334 = vunpack.c.l.b16 %v1295
        %v1335 = vunpack.c.l.b16 %v1296
        %v1336 = vunpack.c.l.b16 %v1297
        %v1337 = vunpack.c.l.b16 %v1298
        %v1338 = vunpack.c.l.b16 %v1299
        %v1339 = vunpack.c.l.b16 %v1300
        %v1340 = vunpack.c.l.b16 %v1301
        %v1341 = vunpack.c.l.b16 %v1302
        %v1342 = vunpack.c.l.b16 %v1303
        %v1343 = vunpack.c.l.b16 %v1304
        %v1344 = vunpack.c.l.b16 %v1305
        %v1345 = vunpack.c.l.b16 %v1306
        %v1346 = vpack.c.b16 %v1331, %v1330
        %v1347 = vpack.c.b16 %v1333, %v1332
        %v1348 = vpack.c.b16 %v1335, %v1334
        %v1349 = vpack.c.b16 %v1337, %v1336
        %v1350 = vpack.c.b16 %v1339, %v1338
        %v1351 = vpack.c.b16 %v1341, %v1340
        %v1352 = vpack.c.b16 %v1343, %v1342
        %v1353 = vpack.c.b16 %v1345, %v1344
        %1362 = vmatprep.subr.bf16.mxu0 0
        %1363 = vmatpush1.bf16.msra.mxu0 %v1346
        %1364 = vmatprep.subr.bf16.mxu0 0
        %1365 = vmatpush1.bf16.msra.mxu0 %v1347
        %1366 = vmatprep.subr.bf16.mxu0 0
        %1367 = vmatpush1.bf16.msra.mxu0 %v1348
        %1368 = vmatprep.subr.bf16.mxu0 0
        %1369 = vmatpush1.bf16.msra.mxu0 %v1349
        %1370 = vmatprep.subr.bf16.mxu0 0
        %1371 = vmatpush1.bf16.msra.mxu0 %v1350
        %1372 = vmatprep.subr.bf16.mxu0 0
        %1373 = vmatpush1.bf16.msra.mxu0 %v1351
        %1374 = vmatprep.subr.bf16.mxu0 0
        %1375 = vmatpush1.bf16.msra.mxu0 %v1352
        %1376 = vmatprep.subr.bf16.mxu0 0
        %1377 = vmatpush1.bf16.msra.mxu0 %v1353
        %1378 = vmatprep.subr.bf16.mxu0 0
        %1379 = vmatpush1.bf16.msra.mxu0 0
        %1380 = vmatprep.subr.bf16.mxu0 0
        %1381 = vmatpush1.bf16.msra.mxu0 0
        %1382 = vmatprep.subr.bf16.mxu0 0
        %1383 = vmatpush1.bf16.msra.mxu0 0
        %1384 = vmatprep.subr.bf16.mxu0 0
        %1385 = vmatpush1.bf16.msra.mxu0 0
        %1386 = vmatprep.subr.bf16.mxu0 0
        %1387 = vmatpush1.bf16.msra.mxu0 0
        %1388 = vmatprep.subr.bf16.mxu0 0
        %1389 = vmatpush1.bf16.msra.mxu0 0
        %1390 = vmatprep.subr.bf16.mxu0 0
        %1391 = vmatpush1.bf16.msra.mxu0 0
        %1392 = vmatprep.subr.bf16.mxu0 0
        %1393 = vmatpush1.bf16.msra.mxu0 0
        %1394 = vmatprep.mubr.bf16.mxu0 0
        %1395 = vmatmul.mubr.bf16.gmra.mrb[0].mxu0 %v1290
        %v1396 = vpop.f32.mrb[0].mxu0
        %v1397 = vadd.f32 %v1312, %v1396
        %v1398 = vpop.f32.mrb[0].mxu0
        %v1399 = vpop.f32.mrb[0].mxu0
        %v1400 = vadd.f32 %v1312, %v1399
        %v1401 = vpop.f32.mrb[0].mxu0
        %1402 = vdwg.mxu0
        %v1403 = vadd.f32 %v1397, %v843
        %v1404 = vadd.f32 %v1400, %v844
        %v1405 = vld [vmem:[%s766] sm:$0x1]
        %v1406 = vld [vmem:[%s769] sm:$0x1]
        %1407 = vadd.xlane.f32.xlu0 %v1403
        %v1408 = vpop.xlane.xlu0 %1407
        %1409 = vadd.xlane.f32.xlu0 %v1404
        %v1410 = vpop.xlane.xlu0 %1409
        %v1411 = vrcp.pop 128.0
        %v1412 = vmul.f32 %v1408, %v1411
        %v1413 = vmul.f32 %v1410, %v1411
        %v1414 = vsub.f32 %v1403, %v1412
        %v1415 = vsub.f32 %v1404, %v1413
        %v1416 = vmul.f32 %v1414, %v1414
        %v1417 = vmul.f32 %v1415, %v1415
        %1418 = vadd.xlane.f32.xlu0 %v1416
        %v1419 = vpop.xlane.xlu0 %1418
        %1420 = vadd.xlane.f32.xlu0 %v1417
        %v1421 = vpop.xlane.xlu0 %1420
        %v1422 = vmul.f32 %v1419, %v1411
        %v1423 = vmul.f32 %v1421, %v1411
        %v1424 = vadd.f32 %v1422, 1e-05
        %v1425 = vadd.f32 %v1423, 1e-05
        %v1426 = vrsqrt.pop %v1424
        %v1427 = vrsqrt.pop %v1425
        %v1428 = vmul.f32 %v1414, %v1426
        %v1429 = vmul.f32 %v1415, %v1427
        %v1431 = vlaneseq
        %v1432 = vshrl.u32 %v1431, 7
        %v1433 = vsub.s32 0, %v1432
        %v1434 = vrot.slane %v1405, %v1433
        %v1436 = vmul.f32 %v1428, %v1434
        %v1437 = vmul.f32 %v1429, %v1434
        %v1439 = vlaneseq
        %v1440 = vshrl.u32 %v1439, 7
        %v1441 = vsub.s32 0, %v1440
        %v1442 = vrot.slane %v1406, %v1441
        %v1444 = vadd.f32 %v1436, %v1442
        %v1445 = vadd.f32 %v1437, %v1442
        %v1446 = vpack.c.bf16 %v1445, %v1444
        %v1447 = vld [vmem:[%s774] sm:$0xff]
        %v1448 = vld [vmem:[%s774 + $0x8] sm:$0xff]
        %v1449 = vld [vmem:[%s774 + $0x10] sm:$0xff]
        %v1450 = vld [vmem:[%s774 + $0x18] sm:$0xff]
        %v1451 = vld [vmem:[%s774 + $0x20] sm:$0xff]
        %v1452 = vld [vmem:[%s774 + $0x28] sm:$0xff]
        %v1453 = vld [vmem:[%s774 + $0x30] sm:$0xff]
        %v1454 = vld [vmem:[%s774 + $0x38] sm:$0xff]
        %v1455 = vld [vmem:[%s774 + $0x40] sm:$0xff]
        %v1456 = vld [vmem:[%s774 + $0x48] sm:$0xff]
        %v1457 = vld [vmem:[%s774 + $0x50] sm:$0xff]
        %v1458 = vld [vmem:[%s774 + $0x58] sm:$0xff]
        %v1459 = vld [vmem:[%s774 + $0x60] sm:$0xff]
        %v1460 = vld [vmem:[%s774 + $0x68] sm:$0xff]
        %v1461 = vld [vmem:[%s774 + $0x70] sm:$0xff]
        %v1462 = vld [vmem:[%s774 + $0x78] sm:$0xff]
        %v1463 = vld [vmem:[%s778] sm:$0x3]
        %v1465 = vlaneseq
        %v1466 = vshrl.u32 %v1465, 7
        %v1467 = vsub.s32 0, %v1466
        %v1468 = vrot.slane %v1463, %v1467
        %v1469 = vlaneseq
        %v1470 = vshrl.u32 %v1469, 7
        %v1471 = vsub.s32 1, %v1470
        %v1472 = vrot.slane %v1463, %v1471
        %v1491 = vunpack.c.l.b16 %v1447
        %v1492 = vunpack.c.h.b16 %v1447
        %v1493 = vunpack.c.l.b16 %v1448
        %v1494 = vunpack.c.h.b16 %v1448
        %v1495 = vunpack.c.l.b16 %v1449
        %v1496 = vunpack.c.h.b16 %v1449
        %v1497 = vunpack.c.l.b16 %v1450
        %v1498 = vunpack.c.h.b16 %v1450
        %v1499 = vunpack.c.l.b16 %v1451
        %v1500 = vunpack.c.h.b16 %v1451
        %v1501 = vunpack.c.l.b16 %v1452
        %v1502 = vunpack.c.h.b16 %v1452
        %v1503 = vunpack.c.l.b16 %v1453
        %v1504 = vunpack.c.h.b16 %v1453
        %v1505 = vunpack.c.l.b16 %v1454
        %v1506 = vunpack.c.h.b16 %v1454
        %v1507 = vunpack.c.l.b16 %v1455
        %v1508 = vunpack.c.h.b16 %v1455
        %v1509 = vunpack.c.l.b16 %v1456
        %v1510 = vunpack.c.h.b16 %v1456
        %v1511 = vunpack.c.l.b16 %v1457
        %v1512 = vunpack.c.h.b16 %v1457
        %v1513 = vunpack.c.l.b16 %v1458
        %v1514 = vunpack.c.h.b16 %v1458
        %v1515 = vunpack.c.l.b16 %v1459
        %v1516 = vunpack.c.h.b16 %v1459
        %v1517 = vunpack.c.l.b16 %v1460
        %v1518 = vunpack.c.h.b16 %v1460
        %v1519 = vunpack.c.l.b16 %v1461
        %v1520 = vunpack.c.h.b16 %v1461
        %v1521 = vunpack.c.l.b16 %v1462
        %v1522 = vunpack.c.h.b16 %v1462
        %v1523 = vpack.c.b16 %v1493, %v1491
        %v1524 = vpack.c.b16 %v1494, %v1492
        %v1525 = vpack.c.b16 %v1497, %v1495
        %v1526 = vpack.c.b16 %v1498, %v1496
        %v1527 = vpack.c.b16 %v1501, %v1499
        %v1528 = vpack.c.b16 %v1502, %v1500
        %v1529 = vpack.c.b16 %v1505, %v1503
        %v1530 = vpack.c.b16 %v1506, %v1504
        %v1531 = vpack.c.b16 %v1509, %v1507
        %v1532 = vpack.c.b16 %v1510, %v1508
        %v1533 = vpack.c.b16 %v1513, %v1511
        %v1534 = vpack.c.b16 %v1514, %v1512
        %v1535 = vpack.c.b16 %v1517, %v1515
        %v1536 = vpack.c.b16 %v1518, %v1516
        %v1537 = vpack.c.b16 %v1521, %v1519
        %v1538 = vpack.c.b16 %v1522, %v1520
        %1555 = vmatprep.subr.bf16.mxu0 %v1524
        %1556 = vmatpush1.bf16.msra.mxu0 %v1523
        %1557 = vmatprep.subr.bf16.mxu0 %v1526
        %1558 = vmatpush1.bf16.msra.mxu0 %v1525
        %1559 = vmatprep.subr.bf16.mxu0 %v1528
        %1560 = vmatpush1.bf16.msra.mxu0 %v1527
        %1561 = vmatprep.subr.bf16.mxu0 %v1530
        %1562 = vmatpush1.bf16.msra.mxu0 %v1529
        %1563 = vmatprep.subr.bf16.mxu0 %v1532
        %1564 = vmatpush1.bf16.msra.mxu0 %v1531
        %1565 = vmatprep.subr.bf16.mxu0 %v1534
        %1566 = vmatpush1.bf16.msra.mxu0 %v1533
        %1567 = vmatprep.subr.bf16.mxu0 %v1536
        %1568 = vmatpush1.bf16.msra.mxu0 %v1535
        %1569 = vmatprep.subr.bf16.mxu0 %v1538
        %1570 = vmatpush1.bf16.msra.mxu0 %v1537
        %1571 = vmatprep.subr.bf16.mxu0 0
        %1572 = vmatpush1.bf16.msra.mxu0 0
        %1573 = vmatprep.subr.bf16.mxu0 0
        %1574 = vmatpush1.bf16.msra.mxu0 0
        %1575 = vmatprep.subr.bf16.mxu0 0
        %1576 = vmatpush1.bf16.msra.mxu0 0
        %1577 = vmatprep.subr.bf16.mxu0 0
        %1578 = vmatpush1.bf16.msra.mxu0 0
        %1579 = vmatprep.subr.bf16.mxu0 0
        %1580 = vmatpush1.bf16.msra.mxu0 0
        %1581 = vmatprep.subr.bf16.mxu0 0
        %1582 = vmatpush1.bf16.msra.mxu0 0
        %1583 = vmatprep.subr.bf16.mxu0 0
        %1584 = vmatpush1.bf16.msra.mxu0 0
        %1585 = vmatprep.subr.bf16.mxu0 0
        %1586 = vmatpush1.bf16.msra.mxu0 0
        %1587 = vmatprep.mubr.bf16.mxu0 0
        %1588 = vmatmul.mubr.bf16.gmra.mrb[0].mxu0 %v1446
        %v1589 = vpop.f32.mrb[0].mxu0
        %v1590 = vadd.f32 %v1468, %v1589
        %v1591 = vpop.f32.mrb[0].mxu0
        %v1592 = vadd.f32 %v1472, %v1591
        %v1593 = vpop.f32.mrb[0].mxu0
        %v1594 = vadd.f32 %v1468, %v1593
        %v1595 = vpop.f32.mrb[0].mxu0
        %v1596 = vadd.f32 %v1472, %v1595
        %1597 = vdwg.mxu0
        %v1598 = vmul.f32 %v1590, 0.5
        %v1599 = vmul.f32 %v1592, 0.5
        %v1600 = vmul.f32 %v1594, 0.5
        %v1601 = vmul.f32 %v1596, 0.5
        %v1602 = vmul.f32 %v1590, 0.044715
        %v1603 = vmul.f32 %v1592, 0.044715
        %v1604 = vmul.f32 %v1594, 0.044715
        %v1605 = vmul.f32 %v1596, 0.044715
        %v1606 = vmul.f32 %v1602, %v1590
        %v1607 = vmul.f32 %v1603, %v1592
        %v1608 = vmul.f32 %v1604, %v1594
        %v1609 = vmul.f32 %v1605, %v1596
        %v1610 = vmul.f32 %v1606, %v1590
        %v1611 = vmul.f32 %v1607, %v1592
        %v1612 = vmul.f32 %v1608, %v1594
        %v1613 = vmul.f32 %v1609, %v1596
        %v1614 = vadd.f32 %v1590, %v1610
        %v1615 = vadd.f32 %v1592, %v1611
        %v1616 = vadd.f32 %v1594, %v1612
        %v1617 = vadd.f32 %v1596, %v1613
        %v1618 = vmul.f32 %v1614, 0.7978846
        %v1619 = vmul.f32 %v1615, 0.7978846
        %v1620 = vmul.f32 %v1616, 0.7978846
        %v1621 = vmul.f32 %v1617, 0.7978846
        %v1622 = vtanh.pop %v1618
        %v1623 = vtanh.pop %v1619
        %v1624 = vtanh.pop %v1620
        %v1625 = vtanh.pop %v1621
        %v1626 = vadd.f32 %v1622, 1.0
        %v1627 = vadd.f32 %v1623, 1.0
        %v1628 = vadd.f32 %v1624, 1.0
        %v1629 = vadd.f32 %v1625, 1.0
        %v1630 = vmul.f32 %v1598, %v1626
        %v1631 = vmul.f32 %v1599, %v1627
        %v1632 = vmul.f32 %v1600, %v1628
        %v1633 = vmul.f32 %v1601, %v1629
        %v1634 = vpack.c.bf16 %v1632, %v1630
        %v1635 = vpack.c.bf16 %v1633, %v1631
        %v1636 = vld [vmem:[%s783] sm:$0xf]
        %v1637 = vld [vmem:[%s783 + $0x4] sm:$0xf]
        %v1638 = vld [vmem:[%s783 + $0x8] sm:$0xf]
        %v1639 = vld [vmem:[%s783 + $0xc] sm:$0xf]
        %v1640 = vld [vmem:[%s783 + $0x10] sm:$0xf]
        %v1641 = vld [vmem:[%s783 + $0x14] sm:$0xf]
        %v1642 = vld [vmem:[%s783 + $0x18] sm:$0xf]
        %v1643 = vld [vmem:[%s783 + $0x1c] sm:$0xf]
        %v1644 = vld [vmem:[%s783 + $0x20] sm:$0xf]
        %v1645 = vld [vmem:[%s783 + $0x24] sm:$0xf]
        %v1646 = vld [vmem:[%s783 + $0x28] sm:$0xf]
        %v1647 = vld [vmem:[%s783 + $0x2c] sm:$0xf]
        %v1648 = vld [vmem:[%s783 + $0x30] sm:$0xf]
        %v1649 = vld [vmem:[%s783 + $0x34] sm:$0xf]
        %v1650 = vld [vmem:[%s783 + $0x38] sm:$0xf]
        %v1651 = vld [vmem:[%s783 + $0x3c] sm:$0xf]
        %v1652 = vld [vmem:[%s783 + $0x40] sm:$0xf]
        %v1653 = vld [vmem:[%s783 + $0x44] sm:$0xf]
        %v1654 = vld [vmem:[%s783 + $0x48] sm:$0xf]
        %v1655 = vld [vmem:[%s783 + $0x4c] sm:$0xf]
        %v1656 = vld [vmem:[%s783 + $0x50] sm:$0xf]
        %v1657 = vld [vmem:[%s783 + $0x54] sm:$0xf]
        %v1658 = vld [vmem:[%s783 + $0x58] sm:$0xf]
        %v1659 = vld [vmem:[%s783 + $0x5c] sm:$0xf]
        %v1660 = vld [vmem:[%s783 + $0x60] sm:$0xf]
        %v1661 = vld [vmem:[%s783 + $0x64] sm:$0xf]
        %v1662 = vld [vmem:[%s783 + $0x68] sm:$0xf]
        %v1663 = vld [vmem:[%s783 + $0x6c] sm:$0xf]
        %v1664 = vld [vmem:[%s783 + $0x70] sm:$0xf]
        %v1665 = vld [vmem:[%s783 + $0x74] sm:$0xf]
        %v1666 = vld [vmem:[%s783 + $0x78] sm:$0xf]
        %v1667 = vld [vmem:[%s783 + $0x7c] sm:$0xf]
        %v1668 = vld [vmem:[%s786] sm:$0x1]
        %v1670 = vlaneseq
        %v1671 = vshrl.u32 %v1670, 7
        %v1672 = vsub.s32 0, %v1671
        %v1673 = vrot.slane %v1668, %v1672
        %v1707 = vunpack.c.l.b16 %v1636
        %v1708 = vunpack.c.l.b16 %v1637
        %v1709 = vunpack.c.l.b16 %v1638
        %v1710 = vunpack.c.l.b16 %v1639
        %v1711 = vunpack.c.l.b16 %v1640
        %v1712 = vunpack.c.l.b16 %v1641
        %v1713 = vunpack.c.l.b16 %v1642
        %v1714 = vunpack.c.l.b16 %v1643
        %v1715 = vunpack.c.l.b16 %v1644
        %v1716 = vunpack.c.l.b16 %v1645
        %v1717 = vunpack.c.l.b16 %v1646
        %v1718 = vunpack.c.l.b16 %v1647
        %v1719 = vunpack.c.l.b16 %v1648
        %v1720 = vunpack.c.l.b16 %v1649
        %v1721 = vunpack.c.l.b16 %v1650
        %v1722 = vunpack.c.l.b16 %v1651
        %v1723 = vunpack.c.l.b16 %v1652
        %v1724 = vunpack.c.l.b16 %v1653
        %v1725 = vunpack.c.l.b16 %v1654
        %v1726 = vunpack.c.l.b16 %v1655
        %v1727 = vunpack.c.l.b16 %v1656
        %v1728 = vunpack.c.l.b16 %v1657
        %v1729 = vunpack.c.l.b16 %v1658
        %v1730 = vunpack.c.l.b16 %v1659
        %v1731 = vunpack.c.l.b16 %v1660
        %v1732 = vunpack.c.l.b16 %v1661
        %v1733 = vunpack.c.l.b16 %v1662
        %v1734 = vunpack.c.l.b16 %v1663
        %v1735 = vunpack.c.l.b16 %v1664
        %v1736 = vunpack.c.l.b16 %v1665
        %v1737 = vunpack.c.l.b16 %v1666
        %v1738 = vunpack.c.l.b16 %v1667
        %v1739 = vpack.c.b16 %v1708, %v1707
        %v1740 = vpack.c.b16 %v1710, %v1709
        %v1741 = vpack.c.b16 %v1712, %v1711
        %v1742 = vpack.c.b16 %v1714, %v1713
        %v1743 = vpack.c.b16 %v1716, %v1715
        %v1744 = vpack.c.b16 %v1718, %v1717
        %v1745 = vpack.c.b16 %v1720, %v1719
        %v1746 = vpack.c.b16 %v1722, %v1721
        %v1747 = vpack.c.b16 %v1724, %v1723
        %v1748 = vpack.c.b16 %v1726, %v1725
        %v1749 = vpack.c.b16 %v1728, %v1727
        %v1750 = vpack.c.b16 %v1730, %v1729
        %v1751 = vpack.c.b16 %v1732, %v1731
        %v1752 = vpack.c.b16 %v1734, %v1733
        %v1753 = vpack.c.b16 %v1736, %v1735
        %v1754 = vpack.c.b16 %v1738, %v1737
        %1771 = vmatprep.subr.bf16.mxu0 0
        %1772 = vmatpush1.bf16.msra.mxu0 %v1739
        %1773 = vmatprep.subr.bf16.mxu0 0
        %1774 = vmatpush1.bf16.msra.mxu0 %v1740
        %1775 = vmatprep.subr.bf16.mxu0 0
        %1776 = vmatpush1.bf16.msra.mxu0 %v1741
        %1777 = vmatprep.subr.bf16.mxu0 0
        %1778 = vmatpush1.bf16.msra.mxu0 %v1742
        %1779 = vmatprep.subr.bf16.mxu0 0
        %1780 = vmatpush1.bf16.msra.mxu0 %v1743
        %1781 = vmatprep.subr.bf16.mxu0 0
        %1782 = vmatpush1.bf16.msra.mxu0 %v1744
        %1783 = vmatprep.subr.bf16.mxu0 0
        %1784 = vmatpush1.bf16.msra.mxu0 %v1745
        %1785 = vmatprep.subr.bf16.mxu0 0
        %1786 = vmatpush1.bf16.msra.mxu0 %v1746
        %1787 = vmatprep.subr.bf16.mxu0 0
        %1788 = vmatpush1.bf16.msra.mxu0 %v1747
        %1789 = vmatprep.subr.bf16.mxu0 0
        %1790 = vmatpush1.bf16.msra.mxu0 %v1748
        %1791 = vmatprep.subr.bf16.mxu0 0
        %1792 = vmatpush1.bf16.msra.mxu0 %v1749
        %1793 = vmatprep.subr.bf16.mxu0 0
        %1794 = vmatpush1.bf16.msra.mxu0 %v1750
        %1795 = vmatprep.subr.bf16.mxu0 0
        %1796 = vmatpush1.bf16.msra.mxu0 %v1751
        %1797 = vmatprep.subr.bf16.mxu0 0
        %1798 = vmatpush1.bf16.msra.mxu0 %v1752
        %1799 = vmatprep.subr.bf16.mxu0 0
        %1800 = vmatpush1.bf16.msra.mxu0 %v1753
        %1801 = vmatprep.subr.bf16.mxu0 0
        %1802 = vmatpush1.bf16.msra.mxu0 %v1754
        %1803 = vmatprep.mubr.bf16.mxu0 %v1635
        %1804 = vmatmul.mubr.bf16.gmra.mrb[0].mxu0 %v1634
        %v1805 = vpop.f32.mrb[0].mxu0
        %v1806 = vadd.f32 %v1673, %v1805
        %v1807 = vpop.f32.mrb[0].mxu0
        %v1808 = vpop.f32.mrb[0].mxu0
        %v1809 = vadd.f32 %v1673, %v1808
        %v1810 = vpop.f32.mrb[0].mxu0
        %1811 = vdwg.mxu0
        %v1812 = vadd.f32 %v1806, %v1444
        %v1813 = vadd.f32 %v1809, %v1445
        %v1814 = vld [vmem:[%s789] sm:$0x1]
        %v1815 = vld [vmem:[%s792] sm:$0x1]
        %1816 = vadd.xlane.f32.xlu0 %v1812
        %v1817 = vpop.xlane.xlu0 %1816
        %1818 = vadd.xlane.f32.xlu0 %v1813
        %v1819 = vpop.xlane.xlu0 %1818
        %v1820 = vmul.f32 %v1817, %v1411
        %v1821 = vmul.f32 %v1819, %v1411
        %v1822 = vsub.f32 %v1812, %v1820
        %v1823 = vsub.f32 %v1813, %v1821
        %v1824 = vmul.f32 %v1822, %v1822
        %v1825 = vmul.f32 %v1823, %v1823
        %1826 = vadd.xlane.f32.xlu0 %v1824
        %v1827 = vpop.xlane.xlu0 %1826
        %1828 = vadd.xlane.f32.xlu0 %v1825
        %v1829 = vpop.xlane.xlu0 %1828
        %v1830 = vmul.f32 %v1827, %v1411
        %v1831 = vmul.f32 %v1829, %v1411
        %v1832 = vadd.f32 %v1830, 1e-05
        %v1833 = vadd.f32 %v1831, 1e-05
        %v1834 = vrsqrt.pop %v1832
        %v1835 = vrsqrt.pop %v1833
        %v1836 = vmul.f32 %v1822, %v1834
        %v1837 = vmul.f32 %v1823, %v1835
        %v1839 = vlaneseq
        %v1840 = vshrl.u32 %v1839, 7
        %v1841 = vsub.s32 0, %v1840
        %v1842 = vrot.slane %v1814, %v1841
        %v1844 = vmul.f32 %v1836, %v1842
        %v1845 = vmul.f32 %v1837, %v1842
        %v1847 = vlaneseq
        %v1848 = vshrl.u32 %v1847, 7
        %v1849 = vsub.s32 0, %v1848
        %v1850 = vrot.slane %v1815, %v1849
        %v1852 = vadd.f32 %v1844, %v1850
        %v1853 = vadd.f32 %v1845, %v1850
        %1854 = vst [vmem:[#allocation2] sm:$0xff] %v1852
        %1855 = vst [vmem:[#allocation2 + $0x8] sm:$0xff] %v1853
        %p1856 = scmp.eq.s32.totalorder %s34, 1
        // Predicated region
        $region101: #{roberta_linear_classifier.1} parent=95 // pred_check
          %p1857 = pneg %p1856
        $region102: #{roberta_linear_classifier.1} parent=95 // pred_check_branch
          %1859 = sbr.rel (%p1857) target = $region104
        $region103: #{roberta_linear_classifier.1} parent=95 // pred_region
          %v1860 = vld [vmem:[#allocation2] ss:$8 sm:$0x3]
          %1861 = vst [vmem:[#allocation5] sm:$0x3] %v1860
          %v1862 = vld [vmem:[%s17] sm:$0xff]
          %v1863 = vld [vmem:[%s17 + $0x8] sm:$0xff]
          %v1864 = vld [vmem:[%s17 + $0x10] sm:$0xff]
          %v1865 = vld [vmem:[%s17 + $0x18] sm:$0xff]
          %v1866 = vld [vmem:[%s17 + $0x20] sm:$0xff]
          %v1867 = vld [vmem:[%s17 + $0x28] sm:$0xff]
          %v1868 = vld [vmem:[%s17 + $0x30] sm:$0xff]
          %v1869 = vld [vmem:[%s17 + $0x38] sm:$0xff]
          %v1870 = vld [vmem:[%s17 + $0x40] sm:$0xff]
          %v1871 = vld [vmem:[%s17 + $0x48] sm:$0xff]
          %v1872 = vld [vmem:[%s17 + $0x50] sm:$0xff]
          %v1873 = vld [vmem:[%s17 + $0x58] sm:$0xff]
          %v1874 = vld [vmem:[%s17 + $0x60] sm:$0xff]
          %v1875 = vld [vmem:[%s17 + $0x68] sm:$0xff]
          %v1876 = vld [vmem:[%s17 + $0x70] sm:$0xff]
          %v1877 = vld [vmem:[%s17 + $0x78] sm:$0xff]
          %v1878 = vld [vmem:[%s18] sm:$0x1]
          %v1880 = vlaneseq
          %v1881 = vshrl.u32 %v1880, 7
          %v1882 = vsub.s32 0, %v1881
          %v1883 = vrot.slane %v1878, %v1882
          %1885 = vmatprep.subr.mxu0 0.0
          %1886 = vmatpush1.msra.mxu0 %v1862
          %1887 = vmatprep.subr.mxu0 0.0
          %1888 = vmatpush1.msra.mxu0 %v1863
          %1889 = vmatprep.subr.mxu0 0.0
          %1890 = vmatpush1.msra.mxu0 %v1864
          %1891 = vmatprep.subr.mxu0 0.0
          %1892 = vmatpush1.msra.mxu0 %v1865
          %1893 = vmatprep.subr.mxu0 0.0
          %1894 = vmatpush1.msra.mxu0 %v1866
          %1895 = vmatprep.subr.mxu0 0.0
          %1896 = vmatpush1.msra.mxu0 %v1867
          %1897 = vmatprep.subr.mxu0 0.0
          %1898 = vmatpush1.msra.mxu0 %v1868
          %1899 = vmatprep.subr.mxu0 0.0
          %1900 = vmatpush1.msra.mxu0 %v1869
          %1901 = vmatprep.subr.mxu0 0.0
          %1902 = vmatpush1.msra.mxu0 %v1870
          %1903 = vmatprep.subr.mxu0 0.0
          %1904 = vmatpush1.msra.mxu0 %v1871
          %1905 = vmatprep.subr.mxu0 0.0
          %1906 = vmatpush1.msra.mxu0 %v1872
          %1907 = vmatprep.subr.mxu0 0.0
          %1908 = vmatpush1.msra.mxu0 %v1873
          %1909 = vmatprep.subr.mxu0 0.0
          %1910 = vmatpush1.msra.mxu0 %v1874
          %1911 = vmatprep.subr.mxu0 0.0
          %1912 = vmatpush1.msra.mxu0 %v1875
          %1913 = vmatprep.subr.mxu0 0.0
          %1914 = vmatpush1.msra.mxu0 %v1876
          %1915 = vmatprep.subr.mxu0 0.0
          %1916 = vmatpush1.msra.mxu0 %v1877
          %1917 = vmatprep.subr.mxu0 0.0
          %1918 = vmatpush1.msra.mxu0 0.0
          %1919 = vmatprep.subr.mxu0 0.0
          %1920 = vmatpush1.msra.mxu0 0.0
          %1921 = vmatprep.subr.mxu0 0.0
          %1922 = vmatpush1.msra.mxu0 0.0
          %1923 = vmatprep.subr.mxu0 0.0
          %1924 = vmatpush1.msra.mxu0 0.0
          %1925 = vmatprep.subr.mxu0 0.0
          %1926 = vmatpush1.msra.mxu0 0.0
          %1927 = vmatprep.subr.mxu0 0.0
          %1928 = vmatpush1.msra.mxu0 0.0
          %1929 = vmatprep.subr.mxu0 0.0
          %1930 = vmatpush1.msra.mxu0 0.0
          %1931 = vmatprep.subr.mxu0 0.0
          %1932 = vmatpush1.msra.mxu0 0.0
          %1933 = vmatprep.subr.mxu0 0.0
          %1934 = vmatpush1.msra.mxu0 0.0
          %1935 = vmatprep.subr.mxu0 0.0
          %1936 = vmatpush1.msra.mxu0 0.0
          %1937 = vmatprep.subr.mxu0 0.0
          %1938 = vmatpush1.msra.mxu0 0.0
          %1939 = vmatprep.subr.mxu0 0.0
          %1940 = vmatpush1.msra.mxu0 0.0
          %1941 = vmatprep.subr.mxu0 0.0
          %1942 = vmatpush1.msra.mxu0 0.0
          %1943 = vmatprep.subr.mxu0 0.0
          %1944 = vmatpush1.msra.mxu0 0.0
          %1945 = vmatprep.subr.mxu0 0.0
          %1946 = vmatpush1.msra.mxu0 0.0
          %1947 = vmatprep.subr.mxu0 0.0
          %1948 = vmatpush1.msra.mxu0 0.0
          %1949 = vmatprep.mubr.f32.mxu0 0.0
          %1950 = vmatmul.mubr.f32.gmra.mrb[0].mxu0 %v1860
          %v1951 = vpop.f32.mrb[0].mxu0
          %v1952 = vadd.f32 %v1883, %v1951
          %v1953 = vpop.f32.mrb[0].mxu0
          %1954 = vdwg.mxu0
          %1955 = vst [vmem:[#allocation3] sm:$0x3] %v1952
        $region104: #{roberta_linear_classifier.1} parent=95 // pred_fallthru
          _
        // Predicated region
        $region105: #{roberta_linear_classifier.1} parent=95 // pred_check
          %p1956 = pneg %p506
        $region106: #{roberta_linear_classifier.1} parent=95 // pred_check_branch
          %1958 = sbr.rel (%p1956) target = $region108
        $region107: #{roberta_linear_classifier.1} parent=95 // pred_region
          %s1960 = ssub.s32 32, 32
          %1961 = vsyncadd [#allocation4], %s1960
          %s1963 = sshll.u32 [#allocation3], 4
          %s1964 = int_to_ptr.vmem [resolvable:$true] %s1963
          %1966 = dma.vmem_to_hbm [thread:$0]  %s1964, 32, %s19, [#allocation4]
        $region108: #{roberta_linear_classifier.1} parent=95 // pred_fallthru
          _
        // Predicated region
        $region109: #{roberta_linear_classifier.1} parent=95 // pred_check
          %p1967 = pneg %p527
        $region110: #{roberta_linear_classifier.1} parent=95 // pred_check_branch
          %1969 = sbr.rel (%p1967) target = $region112
        $region111: #{roberta_linear_classifier.1} parent=95 // pred_region
          %s1971 = ssub.s32 32, 32
          %1972 = vsyncadd [#allocation6], %s1971
          %s1974 = sshll.u32 [#allocation5], 4
          %s1975 = int_to_ptr.vmem [resolvable:$true] %s1974
          %1977 = dma.vmem_to_hbm [thread:$0]  %s1975, 32, %s20, [#allocation6]
        $region112: #{roberta_linear_classifier.1} parent=95 // pred_fallthru
          _
        // Predicated region
        $region113: #{roberta_linear_classifier.1} parent=95 // pred_check
          %p1978 = pneg %p506
        $region114: #{roberta_linear_classifier.1} parent=95 // pred_check_branch
          %1980 = sbr.rel (%p1978) target = $region116
        $region115: #{roberta_linear_classifier.1} parent=95 // pred_region
          %1981 = dma.done [#allocation4], 32
        $region116: #{roberta_linear_classifier.1} parent=95 // pred_fallthru
          _
        // Predicated region
        $region117: #{roberta_linear_classifier.1} parent=95 // pred_check
          %p1982 = pneg %p527
        $region118: #{roberta_linear_classifier.1} parent=95 // pred_check_branch
          %1984 = sbr.rel (%p1982) target = $region120
        $region119: #{roberta_linear_classifier.1} parent=95 // pred_region
          %1985 = dma.done [#allocation6], 32
        $region120: #{roberta_linear_classifier.1} parent=95 // pred_fallthru
          _
      $region96: #{roberta_linear_classifier.1} parent=5 // pred_fallthru
        _
      %p1986 = scmp.le.s32.totalorder 2, %s29
      // Predicated region
      $region121: #{roberta_linear_classifier.1} parent=5 // pred_check
        %p1987 = pneg %p1986
      $region122: #{roberta_linear_classifier.1} parent=5 // pred_check_branch
        %1989 = sbr.rel (%p1987) target = $region124
      $region123: #{roberta_linear_classifier.1} parent=5 // pred_region
        %s1990 = ssub.s32 %s29, 2
      $region124: #{roberta_linear_classifier.1} parent=5 // pred_fallthru
        _
    $region6: #{roberta_linear_classifier.1} parent=1 // loop_footer
      %s33 = sadd.s32 1, %s29
    $region7: #{roberta_linear_classifier.1} parent=1 // loop_footer_branch
      %28 = sbr.rel target = $region3
    $region8: #{roberta_linear_classifier.1} parent=1 // loop_exit
      _
    %1991 = vsyncpa [#allocation4], 1
    %s1992 = scalar_lea.sflag [#allocation4], 1
    %1993 = vsyncpa %s1992, 1
    %1994 = vsyncpa [#allocation6], 1

</llo_original>
